<compile_context>
chip_gen: v5e
topology: v5e:2x2
jax: 0.10.0
libtpu: 0.0.40
codegen_flags: <defaults>
</compile_context>

<pallas_src>
import jax
import jax.numpy as jnp
from jax import lax
from jax.experimental import pallas as pl
from jax.experimental.pallas import tpu as pltpu


BN_EPS = 1e-5
TM_CAP = 512                    # lanes per M tile (multiple of 128)
VMEM_LIMIT = 32 * 1024 * 1024   # explicit scoped-VMEM budget, safe on v5e/v6e/v7x


# ----------------------------- Pallas kernels ------------------------------ #

def _conv_bias_kernel(p_ref, w_ref, b_ref, o_ref):
    """o(Cout, tm) = W(Cout, K) @ patches(K, tm) + bias; bf16 lane-dense store."""
    y = jnp.dot(w_ref[...], p_ref[...], preferred_element_type=jnp.float32)
    o_ref[...] = (y + b_ref[...]).astype(o_ref.dtype)


def _conv_stats_kernel(p_ref, w_ref, y_ref, s_ref):
    """Pre-BN conv output (bf16, lane-dense) + per-tile BN partial sums.

    Stats are written as (1, 2, Cout) with Cout on the lane axis (lane-dense
    store); the tiny (G, 2, Cout) slab is reduced in XLA so the grid axis has
    no cross-step dependency and stays "parallel".
    """
    y = jnp.dot(w_ref[...], p_ref[...], preferred_element_type=jnp.float32)
    y_ref[...] = y.astype(y_ref.dtype)
    s_ref[0, 0, :] = jnp.sum(y, axis=1)
    s_ref[0, 1, :] = jnp.sum(y * y, axis=1)


# ------------------------------ kernel wrapper ------------------------------ #

def _conv_pallas(patT, w_mat, *, bias=None, tm):
    """out(Cout, Mp) = W(Cout, K) @ patches(K, Mp) with lane-dense output tiles."""
    Cout, K = w_mat.shape
    Mp = patT.shape[1]
    G = Mp // tm

    p_spec = pl.BlockSpec((K, tm), lambda i: (0, i))
    w_spec = pl.BlockSpec((Cout, K), lambda i: (0, 0))
    y_spec = pl.BlockSpec((Cout, tm), lambda i: (0, i))
    cparams = pltpu.CompilerParams(
        dimension_semantics=("parallel",),      # no cross-step dependency
        vmem_limit_bytes=VMEM_LIMIT,
    )

    if bias is not None:
        b_spec = pl.BlockSpec((Cout, 1), lambda i: (0, 0))
        y = pl.pallas_call(
            _conv_bias_kernel,
            out_shape=jax.ShapeDtypeStruct((Cout, Mp), jnp.bfloat16),
            grid=(G,),
            in_specs=[p_spec, w_spec, b_spec],
            out_specs=y_spec,
            compiler_params=cparams,
        )(patT, w_mat, bias)
        return y, None

    s_spec = pl.BlockSpec((1, 2, Cout), lambda i: (i, 0, 0))
    y, stats = pl.pallas_call(
        _conv_stats_kernel,
        out_shape=(
            jax.ShapeDtypeStruct((Cout, Mp), jnp.bfloat16),
            jax.ShapeDtypeStruct((G, 2, Cout), jnp.float32),
        ),
        grid=(G,),
        in_specs=[p_spec, w_spec],
        out_specs=(y_spec, s_spec),
        compiler_params=cparams,
    )(patT, w_mat)
    return y, stats


# ------------------------------- glue (JAX) --------------------------------- #

def _affine_leaky(x_cnhw, affine):
    """BN affine + LeakyReLU(0.2), applied once per activation element.

    Runs in XLA where it fuses into the downstream im2col pad/slice fusion, so
    the activation makes no extra HBM round trip and the work is NOT duplicated
    over the (k/s)^2 = 4x-expanded patch domain.
    """
    a, b = affine
    z = x_cnhw.astype(jnp.float32) * a[:, None, None, None] + b[:, None, None, None]
    return jnp.where(z > 0, z, 0.2 * z).astype(jnp.bfloat16)


def im2col_T(x_cnhw, k, s, p):
    """(C, N, H, W) -> (K, M) patch matrix.

    K order is (kh, kw, c) with c fastest; M order is (n, ho, wo).  Spatial
    padding is plain zeros (inputs are already post-activation, matching the
    PyTorch Conv2d zero padding of its input).
    """
    C, N, H, W = x_cnhw.shape
    x = jnp.pad(x_cnhw, ((0, 0), (0, 0), (p, p), (p, p))) if p else x_cnhw
    Hp, Wp = H + 2 * p, W + 2 * p
    Ho = (Hp - k) // s + 1
    Wo = (Wp - k) // s + 1
    cols = []
    for kh in range(k):
        for kw in range(k):
            cols.append(x[:, :, kh:kh + s * (Ho - 1) + 1:s,
                             kw:kw + s * (Wo - 1) + 1:s])
    pat = jnp.stack(cols, axis=0)                       # (k*k, C, N, Ho, Wo)
    return pat.reshape(k * k * C, N * Ho * Wo), Ho, Wo


def w_to_mat(w_oihw):
    """PyTorch (Cout, Cin, kh, kw) -> (Cout, kh*kw*Cin), matching im2col_T K-order."""
    cout = w_oihw.shape[0]
    return jnp.transpose(w_oihw, (0, 2, 3, 1)).reshape(cout, -1)


def _tile_m(M):
    """Lane tile and padded extent: Mp is a multiple of 128 and of tm."""
    tm = min(128 * pl.cdiv(M, 128), TM_CAP)
    Mp = tm * pl.cdiv(M, tm)
    return tm, Mp


def conv_layer(x_cnhw, w_oihw, *, padding, bias=None, affine=None):
    """One 4x4 / stride-2 conv in channel-major (C, N, H, W) layout.

    affine: optional per-channel BN affine (a, b) of the *previous* block,
            applied (with LeakyReLU 0.2) to the input before im2col.
    Returns (y (Cout, N, Ho, Wo) bf16 pre-BN, partial stats or None, M).
    """
    Cout = w_oihw.shape[0]
    N = x_cnhw.shape[1]
    k, s = 4, 2

    x = x_cnhw if affine is None else _affine_leaky(x_cnhw, affine)
    x = x.astype(jnp.bfloat16)

    patT, Ho, Wo = im2col_T(x, k, s, padding)
    K, M = patT.shape
    tm, Mp = _tile_m(M)
    if Mp != M:
        # Zero columns -> exactly-zero y columns -> batch stats stay exact.
        patT = jnp.pad(patT, ((0, 0), (0, Mp - M)))

    w_mat = w_to_mat(w_oihw).astype(jnp.bfloat16)
    bias_col = None if bias is None else bias.reshape(Cout, 1).astype(jnp.float32)

    y, stats = _conv_pallas(patT, w_mat, bias=bias_col, tm=tm)
    y = y[:, :M].reshape(Cout, N, Ho, Wo)
    return y, stats, M


def bn_affine_from_stats(stats, M, gamma, beta):
    """Training-mode BatchNorm (batch stats) folded into per-channel (a, b)."""
    s = jnp.sum(stats, axis=0)                          # (2, Cout)
    mean = s[0] / M
    var = jnp.maximum(s[1] / M - mean * mean, 0.0)      # biased var; clamp cancellation
    a = gamma * lax.rsqrt(var + BN_EPS)
    b = beta - mean * a
    return a, b


# ------------------------------- model glue --------------------------------- #

def init_params(key, channels_img, features_d, num_classes, img_size):
    f = features_d
    ks = jax.random.split(key, 8)

    def conv_w(k, cout, cin):
        return jax.random.normal(k, (cout, cin, 4, 4), jnp.float32) * 0.05

    return {
        "embed": jax.random.normal(
            ks[0], (num_classes, img_size, img_size), jnp.float32),
        "conv1": (conv_w(ks[1], f, channels_img + 1),
                  jax.random.normal(ks[2], (f,), jnp.float32) * 0.01),
        "block2": (conv_w(ks[3], 2 * f, f),
                   jnp.ones((2 * f,), jnp.float32),     # gamma (PyTorch init)
                   jnp.zeros((2 * f,), jnp.float32)),   # beta
        "block3": (conv_w(ks[4], 4 * f, 2 * f),
                   jnp.ones((4 * f,), jnp.float32),
                   jnp.zeros((4 * f,), jnp.float32)),
        "block4": (conv_w(ks[5], 8 * f, 4 * f),
                   jnp.ones((8 * f,), jnp.float32),
                   jnp.zeros((8 * f,), jnp.float32)),
        "conv5": (conv_w(ks[6], 1, 8 * f),
                  jax.random.normal(ks[7], (1,), jnp.float32) * 0.01),
    }


@jax.jit
def discriminator_forward(params, x_nchw, labels):
    # embedding(labels).view(N, 1, img_size, img_size), concat on channel dim
    # (tiny gather -> plain XLA).
    emb = jnp.take(params["embed"], labels, axis=0)               # (N, H, W)
    x = jnp.concatenate([x_nchw.astype(jnp.float32), emb[:, None]], axis=1)
    x = jnp.transpose(x, (1, 0, 2, 3))                            # (C+1, N, H, W)

    # layer 1: Conv2d(C+1, f, 4, 2, 1) + bias (no activation in the reference).
    w1, b1 = params["conv1"]
    h, _, _ = conv_layer(x, w1, padding=1, bias=b1)

    # blocks 2-4: Conv(no bias) + BatchNorm2d(batch stats) + LeakyReLU(0.2).
    # Each block's BN affine + LeakyReLU is applied lazily on the next layer's
    # input (once per element, fused by XLA into that layer's im2col).
    pending = None
    for name in ("block2", "block3", "block4"):
        w, gamma, beta = params[name]
        h, stats, M = conv_layer(h, w, padding=1, affine=pending)
        pending = bn_affine_from_stats(stats, M, gamma, beta)

    # layer 5: Conv2d(8f, 1, 4, 2, 0) + bias on a (N, 8f, 4, 4) input -> (N,1,1,1).
    # Cout=1, M=N: a pallas_call's fixed cost dwarfs the compute, so this stays
    # in XLA (consuming block4's pending affine).
    w5, b5 = params["conv5"]
    h = _affine_leaky(h, pending)
    h_nchw = jnp.transpose(h, (1, 0, 2, 3)).astype(jnp.float32)
    out = lax.conv_general_dilated(
        h_nchw, w5, window_strides=(2, 2), padding=[(0, 0), (0, 0)],
        dimension_numbers=("NCHW", "OIHW", "NCHW"))
    return out + b5[None, :, None, None]                          # (N, 1, 1, 1)


# ----------------------------- pure-JAX reference ---------------------------- #

def _conv_ref(x_nchw, w, b, stride, padding):
    out = lax.conv_general_dilated(
        x_nchw, w, window_strides=(stride, stride),
        padding=[(padding, padding), (padding, padding)],
        dimension_numbers=("NCHW", "OIHW", "NCHW"))
    if b is not None:
        out = out + b[None, :, None, None]
    return out


@jax.jit
def reference_forward(params, x, labels):
    emb = jnp.take(params["embed"], labels, axis=0)[:, None]
    h = jnp.concatenate([x, emb], axis=1)
    w1, b1 = params["conv1"]
    h = _conv_ref(h, w1, b1, 2, 1)
    for name in ("block2", "block3", "block4"):
        w, gamma, beta = params[name]
        h = _conv_ref(h, w, None, 2, 1)
        mean = h.mean(axis=(0, 2, 3))
        var = h.var(axis=(0, 2, 3))
        h = (h - mean[None, :, None, None]) * lax.rsqrt(var + BN_EPS)[None, :, None, None]
        h = h * gamma[None, :, None, None] + beta[None, :, None, None]
        h = jnp.where(h > 0, h, 0.2 * h)
    w5, b5 = params["conv5"]
    return _conv_ref(h, w5, b5, 2, 0)


# ---------------------------------- main ------------------------------------ #

if __name__ == "__main__":
    # img_size=64 is the smallest size compatible with five stride-2 4x4 convs -> 1x1.
    channels_img, features_d, num_classes, img_size = 3, 8, 10, 64
    N = 2

    key = jax.random.PRNGKey(0)
    k_param, k_x, k_lbl = jax.random.split(key, 3)

    params = init_params(k_param, channels_img, features_d, num_classes, img_size)
    x = jax.random.normal(k_x, (N, channels_img, img_size, img_size), jnp.float32)
    labels = jax.random.randint(k_lbl, (N,), 0, num_classes).astype(jnp.int32)

    out = jax.block_until_ready(discriminator_forward(params, x, labels))
    assert out.shape == (N, 1, 1, 1), out.shape
    assert bool(jnp.all(jnp.isfinite(out)))

    # Loose sanity check vs a pure-JAX f32 reference (kernel path uses bf16
    # MXU inputs and bf16 activation storage).
    ref = jax.block_until_ready(reference_forward(params, x, labels))
    err = float(jnp.max(jnp.abs(out - ref)))
    scale = float(jnp.max(jnp.abs(ref))) + 1e-6
    assert err / scale < 0.25, (err, scale)

    print("KERNEL_OK")
</pallas_src>

<mosaic_0001>
module attributes {stable_mosaic.version = 11 : i64} {
  func.func @_conv_bias_kernel(%arg0: i32, %arg1: memref<64x512xbf16, #tpu.memory_space<vmem>>, %arg2: memref<8x64xbf16, #tpu.memory_space<vmem>>, %arg3: memref<8x1xf32, #tpu.memory_space<vmem>>, %arg4: memref<8x512xbf16, #tpu.memory_space<vmem>>) attributes {dimension_semantics = [#tpu.dimension_semantics<parallel>], iteration_bounds = array<i64: 4>, scalar_prefetch = 0 : i64, scratch_operands = 0 : i64, tpu.core_type = #tpu.core_type<tc>, window_params = [{transform_indices = @transform_0, window_bounds = array<i64: 64, 512>}, {pipeline_mode = #tpu.pipeline_mode<synchronous>, transform_indices = @transform_1, window_bounds = array<i64: 8, 64>}, {pipeline_mode = #tpu.pipeline_mode<synchronous>, transform_indices = @transform_2, window_bounds = array<i64: 8, 1>}, {transform_indices = @transform_3, window_bounds = array<i64: 8, 512>}]} {
    %c0 = arith.constant 0 : index
    %c0_0 = arith.constant 0 : index
    %0 = vector.load %arg2[%c0, %c0_0] : memref<8x64xbf16, #tpu.memory_space<vmem>>, vector<8x64xbf16>
    %c0_1 = arith.constant 0 : index
    %c0_2 = arith.constant 0 : index
    %1 = vector.load %arg1[%c0_1, %c0_2] : memref<64x512xbf16, #tpu.memory_space<vmem>>, vector<64x512xbf16>
    %cst = arith.constant dense<0.000000e+00> : vector<8x512xf32>
    %2 = tpu.matmul %0, %1, %cst {dimension_numbers = #tpu.dot_dimension_numbers<[1], [0], [0], [1], [0, 0, 1, 1], [], []>} : vector<8x64xbf16>, vector<64x512xbf16>, vector<8x512xf32> -> vector<8x512xf32>
    %c0_3 = arith.constant 0 : index
    %c0_4 = arith.constant 0 : index
    %3 = vector.load %arg3[%c0_3, %c0_4] : memref<8x1xf32, #tpu.memory_space<vmem>>, vector<8x1xf32>
    %4 = vector.broadcast %3 : vector<8x1xf32> to vector<8x512xf32>
    %5 = arith.addf %2, %4 : vector<8x512xf32>
    %6 = arith.truncf %5 : vector<8x512xf32> to vector<8x512xbf16>
    %c0_5 = arith.constant 0 : index
    %c0_6 = arith.constant 0 : index
    %7 = vector.load %arg4[%c0_5, %c0_6] : memref<8x512xbf16, #tpu.memory_space<vmem>>, vector<8x512xbf16>
    tpu.vector_store %arg4[%c0_5, %c0_6], %6 {strides = array<i32>} : memref<8x512xbf16, #tpu.memory_space<vmem>>, vector<8x512xbf16>,
    return
  }
  func.func @transform_0(%arg0: i32) -> (i32, i32) {
    %c0_i32 = arith.constant 0 : i32
    %c0_i32_0 = arith.constant 0 : i32
    return %c0_i32, %arg0 : i32, i32
  }
  func.func @transform_1(%arg0: i32) -> (i32, i32) {
    %c0_i32 = arith.constant 0 : i32
    %c0_i32_0 = arith.constant 0 : i32
    %c0_i32_1 = arith.constant 0 : i32
    return %c0_i32, %c0_i32_0 : i32, i32
  }
  func.func @transform_2(%arg0: i32) -> (i32, i32) {
    %c0_i32 = arith.constant 0 : i32
    %c0_i32_0 = arith.constant 0 : i32
    %c0_i32_1 = arith.constant 0 : i32
    return %c0_i32, %c0_i32_0 : i32, i32
  }
  func.func @transform_3(%arg0: i32) -> (i32, i32) {
    %c0_i32 = arith.constant 0 : i32
    %c0_i32_0 = arith.constant 0 : i32
    return %c0_i32, %arg0 : i32, i32
  }
}

module attributes {stable_mosaic.version = 11 : i64} {
  func.func @_conv_stats_kernel(%arg0: i32, %arg1: memref<128x512xbf16, #tpu.memory_space<vmem>>, %arg2: memref<16x128xbf16, #tpu.memory_space<vmem>>, %arg3: memref<16x512xbf16, #tpu.memory_space<vmem>>, %arg4: memref<1x2x16xf32, #tpu.memory_space<vmem>>) attributes {dimension_semantics = [#tpu.dimension_semantics<parallel>], iteration_bounds = array<i64: 1>, scalar_prefetch = 0 : i64, scratch_operands = 0 : i64, tpu.core_type = #tpu.core_type<tc>, window_params = [{transform_indices = @transform_0, window_bounds = array<i64: 128, 512>}, {pipeline_mode = #tpu.pipeline_mode<synchronous>, transform_indices = @transform_1, window_bounds = array<i64: 16, 128>}, {transform_indices = @transform_2, window_bounds = array<i64: 16, 512>}, {transform_indices = @transform_3, window_bounds = array<i64: 1, 2, 16>}]} {
    %c0 = arith.constant 0 : index
    %c0_0 = arith.constant 0 : index
    %0 = vector.load %arg2[%c0, %c0_0] : memref<16x128xbf16, #tpu.memory_space<vmem>>, vector<16x128xbf16>
    %c0_1 = arith.constant 0 : index
    %c0_2 = arith.constant 0 : index
    %1 = vector.load %arg1[%c0_1, %c0_2] : memref<128x512xbf16, #tpu.memory_space<vmem>>, vector<128x512xbf16>
    %cst = arith.constant dense<0.000000e+00> : vector<16x512xf32>
    %2 = tpu.matmul %0, %1, %cst {dimension_numbers = #tpu.dot_dimension_numbers<[1], [0], [0], [1], [0, 0, 1, 1], [], []>} : vector<16x128xbf16>, vector<128x512xbf16>, vector<16x512xf32> -> vector<16x512xf32>
    %3 = arith.truncf %2 : vector<16x512xf32> to vector<16x512xbf16>
    %c0_3 = arith.constant 0 : index
    %c0_4 = arith.constant 0 : index
    %4 = vector.load %arg3[%c0_3, %c0_4] : memref<16x512xbf16, #tpu.memory_space<vmem>>, vector<16x512xbf16>
    tpu.vector_store %arg3[%c0_3, %c0_4], %3 {strides = array<i32>} : memref<16x512xbf16, #tpu.memory_space<vmem>>, vector<16x512xbf16>,
    %cst_5 = arith.constant dense<0.000000e+00> : vector<16xf32>
    %5 = vector.multi_reduction <add>, %2, %cst_5 [1] : vector<16x512xf32> to vector<16xf32>
    %c0_6 = arith.constant 0 : index
    %c0_7 = arith.constant 0 : index
    %c0_8 = arith.constant 0 : index
    %6 = vector.load %arg4[%c0_6, %c0_7, %c0_8] : memref<1x2x16xf32, #tpu.memory_space<vmem>>, vector<1x1x16xf32>
    %7 = vector.shape_cast %6 : vector<1x1x16xf32> to vector<16xf32>
    %8 = vector.shape_cast %5 : vector<16xf32> to vector<1x1x16xf32>
    tpu.vector_store %arg4[%c0_6, %c0_7, %c0_8], %8 {strides = array<i32>} : memref<1x2x16xf32, #tpu.memory_space<vmem>>, vector<1x1x16xf32>,
    %9 = arith.mulf %2, %2 : vector<16x512xf32>
    %cst_9 = arith.constant dense<0.000000e+00> : vector<16xf32>
    %10 = vector.multi_reduction <add>, %9, %cst_9 [1] : vector<16x512xf32> to vector<16xf32>
    %c0_10 = arith.constant 0 : index
    %c1 = arith.constant 1 : index
    %c0_11 = arith.constant 0 : index
    %11 = vector.load %arg4[%c0_10, %c1, %c0_11] : memref<1x2x16xf32, #tpu.memory_space<vmem>>, vector<1x1x16xf32>
    %12 = vector.shape_cast %11 : vector<1x1x16xf32> to vector<16xf32>
    %13 = vector.shape_cast %10 : vector<16xf32> to vector<1x1x16xf32>
    tpu.vector_store %arg4[%c0_10, %c1, %c0_11], %13 {strides = array<i32>} : memref<1x2x16xf32, #tpu.memory_space<vmem>>, vector<1x1x16xf32>,
    return
  }
  func.func @transform_0(%arg0: i32) -> (i32, i32) {
    %c0_i32 = arith.constant 0 : i32
    %c0_i32_0 = arith.constant 0 : i32
    return %c0_i32, %arg0 : i32, i32
  }
  func.func @transform_1(%arg0: i32) -> (i32, i32) {
    %c0_i32 = arith.constant 0 : i32
    %c0_i32_0 = arith.constant 0 : i32
    %c0_i32_1 = arith.constant 0 : i32
    return %c0_i32, %c0_i32_0 : i32, i32
  }
  func.func @transform_2(%arg0: i32) -> (i32, i32) {
    %c0_i32 = arith.constant 0 : i32
    %c0_i32_0 = arith.constant 0 : i32
    return %c0_i32, %arg0 : i32, i32
  }
  func.func @transform_3(%arg0: i32) -> (i32, i32, i32) {
    %c0_i32 = arith.constant 0 : i32
    %c0_i32_0 = arith.constant 0 : i32
    %c0_i32_1 = arith.constant 0 : i32
    return %arg0, %c0_i32, %c0_i32_0 : i32, i32, i32
  }
}

module attributes {stable_mosaic.version = 11 : i64} {
  func.func @_conv_stats_kernel(%arg0: i32, %arg1: memref<256x128xbf16, #tpu.memory_space<vmem>>, %arg2: memref<32x256xbf16, #tpu.memory_space<vmem>>, %arg3: memref<32x128xbf16, #tpu.memory_space<vmem>>, %arg4: memref<1x2x32xf32, #tpu.memory_space<vmem>>) attributes {dimension_semantics = [#tpu.dimension_semantics<parallel>], iteration_bounds = array<i64: 1>, scalar_prefetch = 0 : i64, scratch_operands = 0 : i64, tpu.core_type = #tpu.core_type<tc>, window_params = [{transform_indices = @transform_0, window_bounds = array<i64: 256, 128>}, {pipeline_mode = #tpu.pipeline_mode<synchronous>, transform_indices = @transform_1, window_bounds = array<i64: 32, 256>}, {transform_indices = @transform_2, window_bounds = array<i64: 32, 128>}, {transform_indices = @transform_3, window_bounds = array<i64: 1, 2, 32>}]} {
    %c0 = arith.constant 0 : index
    %c0_0 = arith.constant 0 : index
    %0 = vector.load %arg2[%c0, %c0_0] : memref<32x256xbf16, #tpu.memory_space<vmem>>, vector<32x256xbf16>
    %c0_1 = arith.constant 0 : index
    %c0_2 = arith.constant 0 : index
    %1 = vector.load %arg1[%c0_1, %c0_2] : memref<256x128xbf16, #tpu.memory_space<vmem>>, vector<256x128xbf16>
    %cst = arith.constant dense<0.000000e+00> : vector<32x128xf32>
    %2 = tpu.matmul %0, %1, %cst {dimension_numbers = #tpu.dot_dimension_numbers<[1], [0], [0], [1], [0, 0, 1, 1], [], []>} : vector<32x256xbf16>, vector<256x128xbf16>, vector<32x128xf32> -> vector<32x128xf32>
    %3 = arith.truncf %2 : vector<32x128xf32> to vector<32x128xbf16>
    %c0_3 = arith.constant 0 : index
    %c0_4 = arith.constant 0 : index
    %4 = vector.load %arg3[%c0_3, %c0_4] : memref<32x128xbf16, #tpu.memory_space<vmem>>, vector<32x128xbf16>
    tpu.vector_store %arg3[%c0_3, %c0_4], %3 {strides = array<i32>} : memref<32x128xbf16, #tpu.memory_space<vmem>>, vector<32x128xbf16>,
    %cst_5 = arith.constant dense<0.000000e+00> : vector<32xf32>
    %5 = vector.multi_reduction <add>, %2, %cst_5 [1] : vector<32x128xf32> to vector<32xf32>
    %c0_6 = arith.constant 0 : index
    %c0_7 = arith.constant 0 : index
    %c0_8 = arith.constant 0 : index
    %6 = vector.load %arg4[%c0_6, %c0_7, %c0_8] : memref<1x2x32xf32, #tpu.memory_space<vmem>>, vector<1x1x32xf32>
    %7 = vector.shape_cast %6 : vector<1x1x32xf32> to vector<32xf32>
    %8 = vector.shape_cast %5 : vector<32xf32> to vector<1x1x32xf32>
    tpu.vector_store %arg4[%c0_6, %c0_7, %c0_8], %8 {strides = array<i32>} : memref<1x2x32xf32, #tpu.memory_space<vmem>>, vector<1x1x32xf32>,
    %9 = arith.mulf %2, %2 : vector<32x128xf32>
    %cst_9 = arith.constant dense<0.000000e+00> : vector<32xf32>
    %10 = vector.multi_reduction <add>, %9, %cst_9 [1] : vector<32x128xf32> to vector<32xf32>
    %c0_10 = arith.constant 0 : index
    %c1 = arith.constant 1 : index
    %c0_11 = arith.constant 0 : index
    %11 = vector.load %arg4[%c0_10, %c1, %c0_11] : memref<1x2x32xf32, #tpu.memory_space<vmem>>, vector<1x1x32xf32>
    %12 = vector.shape_cast %11 : vector<1x1x32xf32> to vector<32xf32>
    %13 = vector.shape_cast %10 : vector<32xf32> to vector<1x1x32xf32>
    tpu.vector_store %arg4[%c0_10, %c1, %c0_11], %13 {strides = array<i32>} : memref<1x2x32xf32, #tpu.memory_space<vmem>>, vector<1x1x32xf32>,
    return
  }
  func.func @transform_0(%arg0: i32) -> (i32, i32) {
    %c0_i32 = arith.constant 0 : i32
    %c0_i32_0 = arith.constant 0 : i32
    return %c0_i32, %arg0 : i32, i32
  }
  func.func @transform_1(%arg0: i32) -> (i32, i32) {
    %c0_i32 = arith.constant 0 : i32
    %c0_i32_0 = arith.constant 0 : i32
    %c0_i32_1 = arith.constant 0 : i32
    return %c0_i32, %c0_i32_0 : i32, i32
  }
  func.func @transform_2(%arg0: i32) -> (i32, i32) {
    %c0_i32 = arith.constant 0 : i32
    %c0_i32_0 = arith.constant 0 : i32
    return %c0_i32, %arg0 : i32, i32
  }
  func.func @transform_3(%arg0: i32) -> (i32, i32, i32) {
    %c0_i32 = arith.constant 0 : i32
    %c0_i32_0 = arith.constant 0 : i32
    %c0_i32_1 = arith.constant 0 : i32
    return %arg0, %c0_i32, %c0_i32_0 : i32, i32, i32
  }
}

module attributes {stable_mosaic.version = 11 : i64} {
  func.func @_conv_stats_kernel(%arg0: i32, %arg1: memref<512x128xbf16, #tpu.memory_space<vmem>>, %arg2: memref<64x512xbf16, #tpu.memory_space<vmem>>, %arg3: memref<64x128xbf16, #tpu.memory_space<vmem>>, %arg4: memref<1x2x64xf32, #tpu.memory_space<vmem>>) attributes {dimension_semantics = [#tpu.dimension_semantics<parallel>], iteration_bounds = array<i64: 1>, scalar_prefetch = 0 : i64, scratch_operands = 0 : i64, tpu.core_type = #tpu.core_type<tc>, window_params = [{transform_indices = @transform_0, window_bounds = array<i64: 512, 128>}, {pipeline_mode = #tpu.pipeline_mode<synchronous>, transform_indices = @transform_1, window_bounds = array<i64: 64, 512>}, {transform_indices = @transform_2, window_bounds = array<i64: 64, 128>}, {transform_indices = @transform_3, window_bounds = array<i64: 1, 2, 64>}]} {
    %c0 = arith.constant 0 : index
    %c0_0 = arith.constant 0 : index
    %0 = vector.load %arg2[%c0, %c0_0] : memref<64x512xbf16, #tpu.memory_space<vmem>>, vector<64x512xbf16>
    %c0_1 = arith.constant 0 : index
    %c0_2 = arith.constant 0 : index
    %1 = vector.load %arg1[%c0_1, %c0_2] : memref<512x128xbf16, #tpu.memory_space<vmem>>, vector<512x128xbf16>
    %cst = arith.constant dense<0.000000e+00> : vector<64x128xf32>
    %2 = tpu.matmul %0, %1, %cst {dimension_numbers = #tpu.dot_dimension_numbers<[1], [0], [0], [1], [0, 0, 1, 1], [], []>} : vector<64x512xbf16>, vector<512x128xbf16>, vector<64x128xf32> -> vector<64x128xf32>
    %3 = arith.truncf %2 : vector<64x128xf32> to vector<64x128xbf16>
    %c0_3 = arith.constant 0 : index
    %c0_4 = arith.constant 0 : index
    %4 = vector.load %arg3[%c0_3, %c0_4] : memref<64x128xbf16, #tpu.memory_space<vmem>>, vector<64x128xbf16>
    tpu.vector_store %arg3[%c0_3, %c0_4], %3 {strides = array<i32>} : memref<64x128xbf16, #tpu.memory_space<vmem>>, vector<64x128xbf16>,
    %cst_5 = arith.constant dense<0.000000e+00> : vector<64xf32>
    %5 = vector.multi_reduction <add>, %2, %cst_5 [1] : vector<64x128xf32> to vector<64xf32>
    %c0_6 = arith.constant 0 : index
    %c0_7 = arith.constant 0 : index
    %c0_8 = arith.constant 0 : index
    %6 = vector.load %arg4[%c0_6, %c0_7, %c0_8] : memref<1x2x64xf32, #tpu.memory_space<vmem>>, vector<1x1x64xf32>
    %7 = vector.shape_cast %6 : vector<1x1x64xf32> to vector<64xf32>
    %8 = vector.shape_cast %5 : vector<64xf32> to vector<1x1x64xf32>
    tpu.vector_store %arg4[%c0_6, %c0_7, %c0_8], %8 {strides = array<i32>} : memref<1x2x64xf32, #tpu.memory_space<vmem>>, vector<1x1x64xf32>,
    %9 = arith.mulf %2, %2 : vector<64x128xf32>
    %cst_9 = arith.constant dense<0.000000e+00> : vector<64xf32>
    %10 = vector.multi_reduction <add>, %9, %cst_9 [1] : vector<64x128xf32> to vector<64xf32>
    %c0_10 = arith.constant 0 : index
    %c1 = arith.constant 1 : index
    %c0_11 = arith.constant 0 : index
    %11 = vector.load %arg4[%c0_10, %c1, %c0_11] : memref<1x2x64xf32, #tpu.memory_space<vmem>>, vector<1x1x64xf32>
    %12 = vector.shape_cast %11 : vector<1x1x64xf32> to vector<64xf32>
    %13 = vector.shape_cast %10 : vector<64xf32> to vector<1x1x64xf32>
    tpu.vector_store %arg4[%c0_10, %c1, %c0_11], %13 {strides = array<i32>} : memref<1x2x64xf32, #tpu.memory_space<vmem>>, vector<1x1x64xf32>,
    return
  }
  func.func @transform_0(%arg0: i32) -> (i32, i32) {
    %c0_i32 = arith.constant 0 : i32
    %c0_i32_0 = arith.constant 0 : i32
    return %c0_i32, %arg0 : i32, i32
  }
  func.func @transform_1(%arg0: i32) -> (i32, i32) {
    %c0_i32 = arith.constant 0 : i32
    %c0_i32_0 = arith.constant 0 : i32
    %c0_i32_1 = arith.constant 0 : i32
    return %c0_i32, %c0_i32_0 : i32, i32
  }
  func.func @transform_2(%arg0: i32) -> (i32, i32) {
    %c0_i32 = arith.constant 0 : i32
    %c0_i32_0 = arith.constant 0 : i32
    return %c0_i32, %arg0 : i32, i32
  }
  func.func @transform_3(%arg0: i32) -> (i32, i32, i32) {
    %c0_i32 = arith.constant 0 : i32
    %c0_i32_0 = arith.constant 0 : i32
    %c0_i32_1 = arith.constant 0 : i32
    return %arg0, %c0_i32, %c0_i32_0 : i32, i32, i32
  }
}

</mosaic_0001>

<llo_original>
// kernel: discriminator_forward.4
$region0: #{discriminator_forward.4}
  #allocation0 [shape = 'u32[]', space=smem, size = 0x4, offset = 0x4, fixed_abs, tag = 'smem constant byte address 0x4 - core index']
  #allocation1 [shape = 'u32[72,128]{1,0:T(1,128)}', space=vmem, size = 0x9000, scoped, tag = 'internal scratch']
  %s0 = inlined_call_operand.vmem [shape: bf16[64,2048], index: 0, kind: input, shape index: {}]
  %s1 = inlined_call_operand.vmem [shape: bf16[8,64], index: 1, kind: input, shape index: {}]
  %s2 = inlined_call_operand.vmem [shape: f32[8,1], index: 2, kind: input, shape index: {}]
  %s3 = inlined_call_operand.vmem [shape: bf16[8,2048], index: 3, kind: output, shape index: {}]
  %s4 = sld [smem:[#allocation0]]
  $region68: #{discriminator_forward.4} parent=0
    _
  %s6 = ssub.s32 1, %s4
  %s7 = scalar_select 0, %s6, %s4
  $region1: #{discriminator_forward.4} parent=0
    #allocation2 [shape = 'u8[131072]{0}', space=vmem, size = 0x20000, scoped, tag = 'input window, operand 0']
    loop: start=0, step=1, limit=6
    $region2: #{discriminator_forward.4} parent=1 // loop_pre_header
      _
    $region3: #{discriminator_forward.4} parent=1 // loop_header
      %s9 = sphi 0, %s13
      %p10 = scmp.ge.s32.totalorder %s9, 6
      %s19 = sphi 0, %s21
      %s22 = sphi 0, %s19
      %s23 = sphi 0, %s22
      %s39 = sphi 0, %s23
      %s43 = sphi 0, %s43
      %s45 = sphi 0, %s43
      %s46 = sphi 0, %s45
      %s60 = sphi 0, %s46
      %s64 = sphi 0, %s64
      %s66 = sphi 0, %s64
      %s67 = sphi 0, %s66
      %s81 = sphi 0, %s67
      %s87 = sphi 0, %s89
      %s90 = sphi 0, %s87
      %s91 = sphi 0, %s90
      %s107 = sphi 0, %s91
    $region4: #{discriminator_forward.4} parent=1 // loop_header_branch
      %12 = sbr.rel (%p10) target = $region8
    $region5: #{discriminator_forward.4} parent=1 // loop_body
      %s14 = ssub.s32 %s9, 1
      %s15 = ssub.s32 %s9, 2
      %s16 = sadd.s32 %s9, 1
      %s17 = ssub.s32 %s9, %s16
      %p18 = scmp.eq.s32.totalorder %s17, 0
      %s20 = sadd.s32 %s19, 1
      %s21 = scalar_select %p18, %s19, %s20
      %p24 = pneg %p18
      %p25 = scmp.eq.s32.totalorder %s9, 3
      %p26 = por %p24, %p25
      %p27 = scmp.ne.s32.totalorder %s19, %s22
      %p28 = scmp.eq.s32.totalorder %s9, 0
      %p29 = por %p27, %p28
      %p30 = scmp.ne.s32.totalorder %s19, %s22
      %p31 = scmp.eq.s32.totalorder %s14, 3
      %p32 = por %p30, %p31
      %p33 = scmp.ne.s32.totalorder %s22, %s23
      %p34 = scmp.eq.s32.totalorder %s14, 0
      %p35 = por %p33, %p34
      %p36 = scmp.ne.s32.totalorder %s22, %s23
      %p37 = scmp.eq.s32.totalorder %s15, 3
      %p38 = por %p36, %p37
      %p40 = scmp.ne.s32.totalorder %s23, %s39
      %p41 = scmp.eq.s32.totalorder %s15, 0
      %p42 = por %p40, %p41
      %s44 = sadd.s32 %s43, 1
      %p47 = scmp.eq.s32.totalorder %s9, 3
      %p48 = scmp.ne.s32.totalorder %s43, %s45
      %p49 = scmp.eq.s32.totalorder %s9, 0
      %p50 = por %p48, %p49
      %p51 = scmp.ne.s32.totalorder %s43, %s45
      %p52 = scmp.eq.s32.totalorder %s14, 3
      %p53 = por %p51, %p52
      %p54 = scmp.ne.s32.totalorder %s45, %s46
      %p55 = scmp.eq.s32.totalorder %s14, 0
      %p56 = por %p54, %p55
      %p57 = scmp.ne.s32.totalorder %s45, %s46
      %p58 = scmp.eq.s32.totalorder %s15, 3
      %p59 = por %p57, %p58
      %p61 = scmp.ne.s32.totalorder %s46, %s60
      %p62 = scmp.eq.s32.totalorder %s15, 0
      %p63 = por %p61, %p62
      %s65 = sadd.s32 %s64, 1
      %p68 = scmp.eq.s32.totalorder %s9, 3
      %p69 = scmp.ne.s32.totalorder %s64, %s66
      %p70 = scmp.eq.s32.totalorder %s9, 0
      %p71 = por %p69, %p70
      %p72 = scmp.ne.s32.totalorder %s64, %s66
      %p73 = scmp.eq.s32.totalorder %s14, 3
      %p74 = por %p72, %p73
      %p75 = scmp.ne.s32.totalorder %s66, %s67
      %p76 = scmp.eq.s32.totalorder %s14, 0
      %p77 = por %p75, %p76
      %p78 = scmp.ne.s32.totalorder %s66, %s67
      %p79 = scmp.eq.s32.totalorder %s15, 3
      %p80 = por %p78, %p79
      %p82 = scmp.ne.s32.totalorder %s67, %s81
      %p83 = scmp.eq.s32.totalorder %s15, 0
      %p84 = por %p82, %p83
      %s85 = ssub.s32 %s9, %s16
      %p86 = scmp.eq.s32.totalorder %s85, 0
      %s88 = sadd.s32 %s87, 1
      %s89 = scalar_select %p86, %s87, %s88
      %p92 = pneg %p86
      %p93 = scmp.eq.s32.totalorder %s9, 3
      %p94 = por %p92, %p93
      %p95 = scmp.ne.s32.totalorder %s87, %s90
      %p96 = scmp.eq.s32.totalorder %s9, 0
      %p97 = por %p95, %p96
      %p98 = scmp.ne.s32.totalorder %s87, %s90
      %p99 = scmp.eq.s32.totalorder %s14, 3
      %p100 = por %p98, %p99
      %p101 = scmp.ne.s32.totalorder %s90, %s91
      %p102 = scmp.eq.s32.totalorder %s14, 0
      %p103 = por %p101, %p102
      %p104 = scmp.ne.s32.totalorder %s90, %s91
      %p105 = scmp.eq.s32.totalorder %s15, 3
      %p106 = por %p104, %p105
      %p108 = scmp.ne.s32.totalorder %s91, %s107
      %p109 = scmp.eq.s32.totalorder %s15, 0
      %p110 = por %p108, %p109
      %p111 = scmp.le.s32.totalorder 1, %s9
      %p112 = scmp.lt.s32.totalorder %s9, 5
      %p113 = pnand %p111, %p112
      %p114 = pneg %p113
      // Predicated region
      $region9: #{discriminator_forward.4} parent=5 // pred_check
        _
      $region10: #{discriminator_forward.4} parent=5 // pred_check_branch
        %116 = sbr.rel (%p113) target = $region12
      $region11: #{discriminator_forward.4} parent=5 // pred_region
        %s117 = ssub.s32 %s9, 1
        // Predicated region
        $region13: #{discriminator_forward.4} parent=11 // pred_check
          %p118 = pneg %p56
        $region14: #{discriminator_forward.4} parent=11 // pred_check_branch
          %120 = sbr.rel (%p118) target = $region16
        $region15: #{discriminator_forward.4} parent=11 // pred_region
          _
        $region16: #{discriminator_forward.4} parent=11 // pred_fallthru
          _
        // Predicated region
        $region17: #{discriminator_forward.4} parent=11 // pred_check
          %p121 = pneg %p77
        $region18: #{discriminator_forward.4} parent=11 // pred_check_branch
          %123 = sbr.rel (%p121) target = $region20
        $region19: #{discriminator_forward.4} parent=11 // pred_region
          _
        $region20: #{discriminator_forward.4} parent=11 // pred_fallthru
          _
      $region12: #{discriminator_forward.4} parent=5 // pred_fallthru
        _
      %p124 = scmp.lt.s32.totalorder %s9, 4
      // Predicated region
      $region21: #{discriminator_forward.4} parent=5 // pred_check
        %p125 = pneg %p124
      $region22: #{discriminator_forward.4} parent=5 // pred_check_branch
        %127 = sbr.rel (%p125) target = $region24
      $region23: #{discriminator_forward.4} parent=5 // pred_region
        // Predicated region
        $region25: #{discriminator_forward.4} parent=23 // pred_check
          %p128 = pneg %p29
        $region26: #{discriminator_forward.4} parent=23 // pred_check_branch
          %130 = sbr.rel (%p128) target = $region28
        $region27: #{discriminator_forward.4} parent=23 // pred_region
          %s131 = sand.u32 %s19, 1
          %s132 = sand.u32 %s19, 1
          %s133 = smul.addr %s132, 128
          %s134 = scalar_lea.vmem [#allocation2], %s133
          %s135 = smul.u32 4, %s9
          %s136 = smul.addr %s135, 4
          %s137 = scalar_lea.vmem %s0, %s136
          // Predicated region
          $region29: #{discriminator_forward.4} parent=27 // pred_check
            _
          $region30: #{discriminator_forward.4} parent=27 // pred_check_branch
            %139 = sbr.rel (0) target = $region32
          $region31: #{discriminator_forward.4} parent=27 // pred_region
            // Predicated region
            $region33: #{discriminator_forward.4} parent=31 // pred_check
              _
            $region34: #{discriminator_forward.4} parent=31 // pred_check_branch
              %141 = sbr.rel (0) target = $region36
            $region35: #{discriminator_forward.4} parent=31 // pred_region
              loop: start=0, step=1, limit=1
              $region37: #{discriminator_forward.4} parent=35 // loop_pre_header
                _
              $region38: #{discriminator_forward.4} parent=35 // loop_header
                %s143 = sphi 0, %s147
                %p144 = scmp.ge.s32.totalorder %s143, 1
                %s148 = sphi %s137, %s137
                %s149 = sphi %s134, %s134
              $region39: #{discriminator_forward.4} parent=35 // loop_header_branch
                %146 = sbr.rel (%p144) target = $region43
              $region40: #{discriminator_forward.4} parent=35 // loop_body
                %v150 = vld [vmem:[%s148] sm:$0xff]
                %151 = vst [vmem:[%s149] sm:$0xff] %v150
                %v152 = vld [vmem:[%s148 + $0x8] sm:$0xff]
                %153 = vst [vmem:[%s149 + $0x8] sm:$0xff] %v152
                %v154 = vld [vmem:[%s148 + $0x40] sm:$0xff]
                %155 = vst [vmem:[%s149 + $0x10] sm:$0xff] %v154
                %v156 = vld [vmem:[%s148 + $0x48] sm:$0xff]
                %157 = vst [vmem:[%s149 + $0x18] sm:$0xff] %v156
                %v158 = vld [vmem:[%s148 + $0x80] sm:$0xff]
                %159 = vst [vmem:[%s149 + $0x20] sm:$0xff] %v158
                %v160 = vld [vmem:[%s148 + $0x88] sm:$0xff]
                %161 = vst [vmem:[%s149 + $0x28] sm:$0xff] %v160
                %v162 = vld [vmem:[%s148 + $0xc0] sm:$0xff]
                %163 = vst [vmem:[%s149 + $0x30] sm:$0xff] %v162
                %v164 = vld [vmem:[%s148 + $0xc8] sm:$0xff]
                %165 = vst [vmem:[%s149 + $0x38] sm:$0xff] %v164
                %v166 = vld [vmem:[%s148 + $0x100] sm:$0xff]
                %167 = vst [vmem:[%s149 + $0x40] sm:$0xff] %v166
                %v168 = vld [vmem:[%s148 + $0x108] sm:$0xff]
                %169 = vst [vmem:[%s149 + $0x48] sm:$0xff] %v168
                %v170 = vld [vmem:[%s148 + $0x140] sm:$0xff]
                %171 = vst [vmem:[%s149 + $0x50] sm:$0xff] %v170
                %v172 = vld [vmem:[%s148 + $0x148] sm:$0xff]
                %173 = vst [vmem:[%s149 + $0x58] sm:$0xff] %v172
                %v174 = vld [vmem:[%s148 + $0x180] sm:$0xff]
                %175 = vst [vmem:[%s149 + $0x60] sm:$0xff] %v174
                %v176 = vld [vmem:[%s148 + $0x188] sm:$0xff]
                %177 = vst [vmem:[%s149 + $0x68] sm:$0xff] %v176
                %v178 = vld [vmem:[%s148 + $0x1c0] sm:$0xff]
                %179 = vst [vmem:[%s149 + $0x70] sm:$0xff] %v178
                %v180 = vld [vmem:[%s148 + $0x1c8] sm:$0xff]
                %181 = vst [vmem:[%s149 + $0x78] sm:$0xff] %v180
              $region41: #{discriminator_forward.4} parent=35 // loop_footer
                %s147 = sadd.s32 1, %s143
              $region42: #{discriminator_forward.4} parent=35 // loop_footer_branch
                %142 = sbr.rel target = $region38
              $region43: #{discriminator_forward.4} parent=35 // loop_exit
                _
            $region36: #{discriminator_forward.4} parent=31 // pred_fallthru
              _
            // Predicated region
            $region44: #{discriminator_forward.4} parent=31 // pred_check
              _
            $region45: #{discriminator_forward.4} parent=31 // pred_check_branch
              %183 = sbr.rel target = $region47
            $region46: #{discriminator_forward.4} parent=31 // pred_region
              _
            $region47: #{discriminator_forward.4} parent=31 // pred_fallthru
              _
          $region32: #{discriminator_forward.4} parent=27 // pred_fallthru
            _
          %184 = vnop
        $region28: #{discriminator_forward.4} parent=23 // pred_fallthru
          _
      $region24: #{discriminator_forward.4} parent=5 // pred_fallthru
        _
      %p185 = scmp.le.s32.totalorder 1, %s9
      %p186 = scmp.lt.s32.totalorder %s9, 5
      %p187 = pnand %p185, %p186
      %p188 = pneg %p187
      // Predicated region
      $region48: #{discriminator_forward.4} parent=5 // pred_check
        _
      $region49: #{discriminator_forward.4} parent=5 // pred_check_branch
        %190 = sbr.rel (%p187) target = $region51
      $region50: #{discriminator_forward.4} parent=5 // pred_region
        %s191 = ssub.s32 %s9, 1
        %s192 = sand.u32 %s22, 1
        %s193 = sand.u32 %s22, 1
        %s194 = smul.addr %s193, 128
        %s195 = scalar_lea.vmem [#allocation2], %s194
        // Predicated region
        $region52: #{discriminator_forward.4} parent=50 // pred_check
          %p196 = pneg %p35
        $region53: #{discriminator_forward.4} parent=50 // pred_check_branch
          %198 = sbr.rel (%p196) target = $region55
        $region54: #{discriminator_forward.4} parent=50 // pred_region
          _
        $region55: #{discriminator_forward.4} parent=50 // pred_fallthru
          _
        %s199 = sand.u32 %s22, 1
        %s200 = sand.u32 %s22, 1
        %s201 = smul.addr %s200, 128
        %s202 = scalar_lea.vmem [#allocation2], %s201
        %p203 = pneg %p35
        %p204 = pneg %p32
        %p205 = pneg %p56
        %p206 = pneg %p53
        %p207 = pneg %p77
        %p208 = pneg %p74
        %p209 = pneg %p103
        %p210 = pneg %p100
        %s211 = smul.u32 4, %s14
        %p212 = scmp.lt.s32.totalorder %s211, 15
        %s213 = scalar_select %p212, %s211, 15
        %s214 = smul.addr %s213, 4
        %s215 = scalar_lea.vmem %s3, %s214
        %s216 = smul.u32 4, %s14
        %s217 = smul.u32 4, %s14
        %p218 = scmp.lt.s32.totalorder %s217, 15
        %s219 = scalar_select %p218, %s217, 15
        %s220 = smul.addr %s219, 4
        %s221 = scalar_lea.vmem %s3, %s220
        %s222 = smul.u32 4, %s14
        %v224 = vld [vmem:[%s1] sm:$0xf]
        %v225 = vld [vmem:[%s195] sm:$0xff]
        %v226 = vld [vmem:[%s195 + $0x8] sm:$0xff]
        %v227 = vld [vmem:[%s195 + $0x10] sm:$0xff]
        %v228 = vld [vmem:[%s195 + $0x18] sm:$0xff]
        %v229 = vld [vmem:[%s195 + $0x20] sm:$0xff]
        %v230 = vld [vmem:[%s195 + $0x28] sm:$0xff]
        %v231 = vld [vmem:[%s195 + $0x30] sm:$0xff]
        %v232 = vld [vmem:[%s195 + $0x38] sm:$0xff]
        %v233 = vld [vmem:[%s195 + $0x40] sm:$0xff]
        %v234 = vld [vmem:[%s195 + $0x48] sm:$0xff]
        %v235 = vld [vmem:[%s195 + $0x50] sm:$0xff]
        %v236 = vld [vmem:[%s195 + $0x58] sm:$0xff]
        %v237 = vld [vmem:[%s195 + $0x60] sm:$0xff]
        %v238 = vld [vmem:[%s195 + $0x68] sm:$0xff]
        %v239 = vld [vmem:[%s195 + $0x70] sm:$0xff]
        %v240 = vld [vmem:[%s195 + $0x78] sm:$0xff]
        %v241 = vld [vmem:[%s2] sm:$0xff]
        %243 = vset.pattern.permute.xlu0 0
        %244 = vperm.xlu0 %243, %v241
        %v245 = vpop.permute.xlu0 %244
        %v263 = vunpack.c.l.b16 %v225
        %v264 = vunpack.c.h.b16 %v225
        %v265 = vunpack.c.l.b16 %v226
        %v266 = vunpack.c.h.b16 %v226
        %v267 = vunpack.c.l.b16 %v227
        %v268 = vunpack.c.h.b16 %v227
        %v269 = vunpack.c.l.b16 %v228
        %v270 = vunpack.c.h.b16 %v228
        %v271 = vunpack.c.l.b16 %v229
        %v272 = vunpack.c.h.b16 %v229
        %v273 = vunpack.c.l.b16 %v230
        %v274 = vunpack.c.h.b16 %v230
        %v275 = vunpack.c.l.b16 %v231
        %v276 = vunpack.c.h.b16 %v231
        %v277 = vunpack.c.l.b16 %v232
        %v278 = vunpack.c.h.b16 %v232
        %v279 = vunpack.c.l.b16 %v233
        %v280 = vunpack.c.h.b16 %v233
        %v281 = vunpack.c.l.b16 %v234
        %v282 = vunpack.c.h.b16 %v234
        %v283 = vunpack.c.l.b16 %v235
        %v284 = vunpack.c.h.b16 %v235
        %v285 = vunpack.c.l.b16 %v236
        %v286 = vunpack.c.h.b16 %v236
        %v287 = vunpack.c.l.b16 %v237
        %v288 = vunpack.c.h.b16 %v237
        %v289 = vunpack.c.l.b16 %v238
        %v290 = vunpack.c.h.b16 %v238
        %v291 = vunpack.c.l.b16 %v239
        %v292 = vunpack.c.h.b16 %v239
        %v293 = vunpack.c.l.b16 %v240
        %v294 = vunpack.c.h.b16 %v240
        %v295 = vpack.c.b16 %v267, %v263
        %v296 = vpack.c.b16 %v268, %v264
        %v297 = vpack.c.b16 %v269, %v265
        %v298 = vpack.c.b16 %v270, %v266
        %v299 = vpack.c.b16 %v275, %v271
        %v300 = vpack.c.b16 %v276, %v272
        %v301 = vpack.c.b16 %v277, %v273
        %v302 = vpack.c.b16 %v278, %v274
        %v303 = vpack.c.b16 %v283, %v279
        %v304 = vpack.c.b16 %v284, %v280
        %v305 = vpack.c.b16 %v285, %v281
        %v306 = vpack.c.b16 %v286, %v282
        %v307 = vpack.c.b16 %v291, %v287
        %v308 = vpack.c.b16 %v292, %v288
        %v309 = vpack.c.b16 %v293, %v289
        %v310 = vpack.c.b16 %v294, %v290
        %vm327 = vcmask 523264
        %v329 = vsel %vm327, %v224, 0
        %331 = vmatpush.bf16.msra.mxu0 0
        %332 = vmatpush.bf16.msra.mxu0 0
        %333 = vmatpush.bf16.msra.mxu0 0
        %334 = vmatpush.bf16.msra.mxu0 0
        %335 = vmatpush.bf16.msra.mxu0 %v307
        %336 = vmatpush.bf16.msra.mxu0 %v303
        %337 = vmatpush.bf16.msra.mxu0 %v299
        %338 = vmatpush.bf16.msra.mxu0 %v295
        %339 = vmatmul.bf16.gmra.mxu0 %v329
        %v340 = vpop.f32.mrf.mxu0
        %v341 = vadd.f32 %v245, %v340
        %v342 = vpop.f32.mrf.mxu0
        %343 = vdwg.mxu0
        %344 = vmatpush.bf16.msra.mxu0 0
        %345 = vmatpush.bf16.msra.mxu0 0
        %346 = vmatpush.bf16.msra.mxu0 0
        %347 = vmatpush.bf16.msra.mxu0 0
        %348 = vmatpush.bf16.msra.mxu0 %v308
        %349 = vmatpush.bf16.msra.mxu0 %v304
        %350 = vmatpush.bf16.msra.mxu0 %v300
        %351 = vmatpush.bf16.msra.mxu0 %v296
        %352 = vmatmul.bf16.gmra.mxu0 %v329
        %v353 = vpop.f32.mrf.mxu0
        %v354 = vadd.f32 %v245, %v353
        %v355 = vpop.f32.mrf.mxu0
        %356 = vdwg.mxu0
        %357 = vmatpush.bf16.msra.mxu0 0
        %358 = vmatpush.bf16.msra.mxu0 0
        %359 = vmatpush.bf16.msra.mxu0 0
        %360 = vmatpush.bf16.msra.mxu0 0
        %361 = vmatpush.bf16.msra.mxu0 %v309
        %362 = vmatpush.bf16.msra.mxu0 %v305
        %363 = vmatpush.bf16.msra.mxu0 %v301
        %364 = vmatpush.bf16.msra.mxu0 %v297
        %365 = vmatmul.bf16.gmra.mxu0 %v329
        %v366 = vpop.f32.mrf.mxu0
        %v367 = vadd.f32 %v245, %v366
        %v368 = vpop.f32.mrf.mxu0
        %369 = vdwg.mxu0
        %370 = vmatpush.bf16.msra.mxu0 0
        %371 = vmatpush.bf16.msra.mxu0 0
        %372 = vmatpush.bf16.msra.mxu0 0
        %373 = vmatpush.bf16.msra.mxu0 0
        %374 = vmatpush.bf16.msra.mxu0 %v310
        %375 = vmatpush.bf16.msra.mxu0 %v306
        %376 = vmatpush.bf16.msra.mxu0 %v302
        %377 = vmatpush.bf16.msra.mxu0 %v298
        %378 = vmatmul.bf16.gmra.mxu0 %v329
        %v379 = vpop.f32.mrf.mxu0
        %v380 = vadd.f32 %v245, %v379
        %v381 = vpop.f32.mrf.mxu0
        %382 = vdwg.mxu0
        %v383 = vpack.c.bf16 %v354, %v341
        %v384 = vpack.c.bf16 %v380, %v367
        %385 = vst [vmem:[%s221] sm:$0xff] %v383
        %386 = vst [vmem:[%s221 + $0x8] sm:$0xff] %v384
        %s387 = smul.u32 4, %s14
        %p388 = scmp.lt.s32.totalorder %s387, 15
        %s389 = scalar_select %p388, %s387, 15
        %s390 = smul.addr %s389, 4
        %s391 = scalar_lea.vmem %s3, %s390
        // Predicated region
        $region56: #{discriminator_forward.4} parent=50 // pred_check
          %p392 = pneg %p100
        $region57: #{discriminator_forward.4} parent=50 // pred_check_branch
          %394 = sbr.rel (%p392) target = $region59
        $region58: #{discriminator_forward.4} parent=50 // pred_region
          %s395 = smul.u32 4, %s14
        $region59: #{discriminator_forward.4} parent=50 // pred_fallthru
          _
      $region51: #{discriminator_forward.4} parent=5 // pred_fallthru
        _
      %p396 = scmp.le.s32.totalorder 2, %s9
      // Predicated region
      $region60: #{discriminator_forward.4} parent=5 // pred_check
        %p397 = pneg %p396
      $region61: #{discriminator_forward.4} parent=5 // pred_check_branch
        %399 = sbr.rel (%p397) target = $region63
      $region62: #{discriminator_forward.4} parent=5 // pred_region
        %s400 = ssub.s32 %s9, 2
        // Predicated region
        $region64: #{discriminator_forward.4} parent=62 // pred_check
          %p401 = pneg %p106
        $region65: #{discriminator_forward.4} parent=62 // pred_check_branch
          %403 = sbr.rel (%p401) target = $region67
        $region66: #{discriminator_forward.4} parent=62 // pred_region
          %s404 = smul.u32 4, %s15
          %p405 = scmp.lt.s32.totalorder %s404, 15
          %s406 = scalar_select %p405, %s404, 15
          %s407 = smul.addr %s406, 4
          %s408 = scalar_lea.vmem %s3, %s407
        $region67: #{discriminator_forward.4} parent=62 // pred_fallthru
          _
      $region63: #{discriminator_forward.4} parent=5 // pred_fallthru
        _
    $region6: #{discriminator_forward.4} parent=1 // loop_footer
      %s13 = sadd.s32 1, %s9
    $region7: #{discriminator_forward.4} parent=1 // loop_footer_branch
      %8 = sbr.rel target = $region3
    $region8: #{discriminator_forward.4} parent=1 // loop_exit
      _

// kernel: discriminator_forward.5
$region0: #{discriminator_forward.5}
  #allocation0 [shape = 'u32[]', space=smem, size = 0x4, offset = 0x4, fixed_abs, tag = 'smem constant byte address 0x4 - core index']
  #allocation1 [shape = 'u32[72,128]{1,0:T(1,128)}', space=vmem, size = 0x9000, scoped, tag = 'internal scratch']
  %s0 = inlined_call_operand.vmem [shape: bf16[128,512], index: 0, kind: input, shape index: {}]
  %s1 = inlined_call_operand.vmem [shape: bf16[16,128], index: 1, kind: input, shape index: {}]
  %s2 = inlined_call_operand.vmem [shape: bf16[16,512], index: 2, kind: output, shape index: {0}]
  %s3 = inlined_call_operand.vmem [shape: f32[1,2,16], index: 3, kind: output, shape index: {1}]
  %4 = xla_tuple %s2, %s3
  %s5 = sld [smem:[#allocation0]]
  $region26: #{discriminator_forward.5} parent=0
    _
  %s7 = ssub.s32 1, %s5
  %s8 = scalar_select 0, %s7, %s5
  // Predicated region
  $region2: #{discriminator_forward.5} parent=0 // pred_check
    _
  $region3: #{discriminator_forward.5} parent=0 // pred_check_branch
    %10 = sbr.rel (0) target = $region5
  $region4: #{discriminator_forward.5} parent=0 // pred_region
    _
  $region5: #{discriminator_forward.5} parent=0 // pred_fallthru
    _
  // Predicated region
  $region6: #{discriminator_forward.5} parent=0 // pred_check
    _
  $region7: #{discriminator_forward.5} parent=0 // pred_check_branch
    %12 = sbr.rel (0) target = $region9
  $region8: #{discriminator_forward.5} parent=0 // pred_region
    _
  $region9: #{discriminator_forward.5} parent=0 // pred_fallthru
    _
  %v13 = vld [vmem:[%s1] sm:$0xf]
  %v14 = vld [vmem:[%s1 + $0x4] sm:$0xf]
  %v15 = vld [vmem:[%s0] sm:$0xff]
  %v16 = vld [vmem:[%s0 + $0x8] sm:$0xff]
  %v17 = vld [vmem:[%s0 + $0x10] sm:$0xff]
  %v18 = vld [vmem:[%s0 + $0x18] sm:$0xff]
  %v19 = vld [vmem:[%s0 + $0x20] sm:$0xff]
  %v20 = vld [vmem:[%s0 + $0x28] sm:$0xff]
  %v21 = vld [vmem:[%s0 + $0x30] sm:$0xff]
  %v22 = vld [vmem:[%s0 + $0x38] sm:$0xff]
  %v23 = vld [vmem:[%s0 + $0x40] sm:$0xff]
  %v24 = vld [vmem:[%s0 + $0x48] sm:$0xff]
  %v25 = vld [vmem:[%s0 + $0x50] sm:$0xff]
  %v26 = vld [vmem:[%s0 + $0x58] sm:$0xff]
  %v27 = vld [vmem:[%s0 + $0x60] sm:$0xff]
  %v28 = vld [vmem:[%s0 + $0x68] sm:$0xff]
  %v29 = vld [vmem:[%s0 + $0x70] sm:$0xff]
  %v30 = vld [vmem:[%s0 + $0x78] sm:$0xff]
  %v31 = vld [vmem:[%s0 + $0x80] sm:$0xff]
  %v32 = vld [vmem:[%s0 + $0x88] sm:$0xff]
  %v33 = vld [vmem:[%s0 + $0x90] sm:$0xff]
  %v34 = vld [vmem:[%s0 + $0x98] sm:$0xff]
  %v35 = vld [vmem:[%s0 + $0xa0] sm:$0xff]
  %v36 = vld [vmem:[%s0 + $0xa8] sm:$0xff]
  %v37 = vld [vmem:[%s0 + $0xb0] sm:$0xff]
  %v38 = vld [vmem:[%s0 + $0xb8] sm:$0xff]
  %v39 = vld [vmem:[%s0 + $0xc0] sm:$0xff]
  %v40 = vld [vmem:[%s0 + $0xc8] sm:$0xff]
  %v41 = vld [vmem:[%s0 + $0xd0] sm:$0xff]
  %v42 = vld [vmem:[%s0 + $0xd8] sm:$0xff]
  %v43 = vld [vmem:[%s0 + $0xe0] sm:$0xff]
  %v44 = vld [vmem:[%s0 + $0xe8] sm:$0xff]
  %v45 = vld [vmem:[%s0 + $0xf0] sm:$0xff]
  %v46 = vld [vmem:[%s0 + $0xf8] sm:$0xff]
  %v49 = vunpack.c.l.b16 %v13
  %v50 = vunpack.c.l.b16 %v14
  %v51 = vpack.c.b16 %v50, %v49
  %v85 = vunpack.c.l.b16 %v15
  %v86 = vunpack.c.h.b16 %v15
  %v87 = vunpack.c.l.b16 %v16
  %v88 = vunpack.c.h.b16 %v16
  %v89 = vunpack.c.l.b16 %v17
  %v90 = vunpack.c.h.b16 %v17
  %v91 = vunpack.c.l.b16 %v18
  %v92 = vunpack.c.h.b16 %v18
  %v93 = vunpack.c.l.b16 %v19
  %v94 = vunpack.c.h.b16 %v19
  %v95 = vunpack.c.l.b16 %v20
  %v96 = vunpack.c.h.b16 %v20
  %v97 = vunpack.c.l.b16 %v21
  %v98 = vunpack.c.h.b16 %v21
  %v99 = vunpack.c.l.b16 %v22
  %v100 = vunpack.c.h.b16 %v22
  %v101 = vunpack.c.l.b16 %v23
  %v102 = vunpack.c.h.b16 %v23
  %v103 = vunpack.c.l.b16 %v24
  %v104 = vunpack.c.h.b16 %v24
  %v105 = vunpack.c.l.b16 %v25
  %v106 = vunpack.c.h.b16 %v25
  %v107 = vunpack.c.l.b16 %v26
  %v108 = vunpack.c.h.b16 %v26
  %v109 = vunpack.c.l.b16 %v27
  %v110 = vunpack.c.h.b16 %v27
  %v111 = vunpack.c.l.b16 %v28
  %v112 = vunpack.c.h.b16 %v28
  %v113 = vunpack.c.l.b16 %v29
  %v114 = vunpack.c.h.b16 %v29
  %v115 = vunpack.c.l.b16 %v30
  %v116 = vunpack.c.h.b16 %v30
  %v117 = vunpack.c.l.b16 %v31
  %v118 = vunpack.c.h.b16 %v31
  %v119 = vunpack.c.l.b16 %v32
  %v120 = vunpack.c.h.b16 %v32
  %v121 = vunpack.c.l.b16 %v33
  %v122 = vunpack.c.h.b16 %v33
  %v123 = vunpack.c.l.b16 %v34
  %v124 = vunpack.c.h.b16 %v34
  %v125 = vunpack.c.l.b16 %v35
  %v126 = vunpack.c.h.b16 %v35
  %v127 = vunpack.c.l.b16 %v36
  %v128 = vunpack.c.h.b16 %v36
  %v129 = vunpack.c.l.b16 %v37
  %v130 = vunpack.c.h.b16 %v37
  %v131 = vunpack.c.l.b16 %v38
  %v132 = vunpack.c.h.b16 %v38
  %v133 = vunpack.c.l.b16 %v39
  %v134 = vunpack.c.h.b16 %v39
  %v135 = vunpack.c.l.b16 %v40
  %v136 = vunpack.c.h.b16 %v40
  %v137 = vunpack.c.l.b16 %v41
  %v138 = vunpack.c.h.b16 %v41
  %v139 = vunpack.c.l.b16 %v42
  %v140 = vunpack.c.h.b16 %v42
  %v141 = vunpack.c.l.b16 %v43
  %v142 = vunpack.c.h.b16 %v43
  %v143 = vunpack.c.l.b16 %v44
  %v144 = vunpack.c.h.b16 %v44
  %v145 = vunpack.c.l.b16 %v45
  %v146 = vunpack.c.h.b16 %v45
  %v147 = vunpack.c.l.b16 %v46
  %v148 = vunpack.c.h.b16 %v46
  %v149 = vpack.c.b16 %v89, %v85
  %v150 = vpack.c.b16 %v90, %v86
  %v151 = vpack.c.b16 %v91, %v87
  %v152 = vpack.c.b16 %v92, %v88
  %v153 = vpack.c.b16 %v97, %v93
  %v154 = vpack.c.b16 %v98, %v94
  %v155 = vpack.c.b16 %v99, %v95
  %v156 = vpack.c.b16 %v100, %v96
  %v157 = vpack.c.b16 %v105, %v101
  %v158 = vpack.c.b16 %v106, %v102
  %v159 = vpack.c.b16 %v107, %v103
  %v160 = vpack.c.b16 %v108, %v104
  %v161 = vpack.c.b16 %v113, %v109
  %v162 = vpack.c.b16 %v114, %v110
  %v163 = vpack.c.b16 %v115, %v111
  %v164 = vpack.c.b16 %v116, %v112
  %v165 = vpack.c.b16 %v121, %v117
  %v166 = vpack.c.b16 %v122, %v118
  %v167 = vpack.c.b16 %v123, %v119
  %v168 = vpack.c.b16 %v124, %v120
  %v169 = vpack.c.b16 %v129, %v125
  %v170 = vpack.c.b16 %v130, %v126
  %v171 = vpack.c.b16 %v131, %v127
  %v172 = vpack.c.b16 %v132, %v128
  %v173 = vpack.c.b16 %v137, %v133
  %v174 = vpack.c.b16 %v138, %v134
  %v175 = vpack.c.b16 %v139, %v135
  %v176 = vpack.c.b16 %v140, %v136
  %v177 = vpack.c.b16 %v145, %v141
  %v178 = vpack.c.b16 %v146, %v142
  %v179 = vpack.c.b16 %v147, %v143
  %v180 = vpack.c.b16 %v148, %v144
  %213 = vmatpush.bf16.msra.mxu0 %v177
  %214 = vmatpush.bf16.msra.mxu0 %v173
  %215 = vmatpush.bf16.msra.mxu0 %v169
  %216 = vmatpush.bf16.msra.mxu0 %v165
  %217 = vmatpush.bf16.msra.mxu0 %v161
  %218 = vmatpush.bf16.msra.mxu0 %v157
  %219 = vmatpush.bf16.msra.mxu0 %v153
  %220 = vmatpush.bf16.msra.mxu0 %v149
  %221 = vmatmul.bf16.gmra.mxu0 %v51
  %v222 = vpop.f32.mrf.mxu0
  %v223 = vadd.f32 0.0, %v222
  %v224 = vpop.f32.mrf.mxu0
  %v225 = vadd.f32 0.0, %v224
  %226 = vdwg.mxu0
  %227 = vmatpush.bf16.msra.mxu0 %v178
  %228 = vmatpush.bf16.msra.mxu0 %v174
  %229 = vmatpush.bf16.msra.mxu0 %v170
  %230 = vmatpush.bf16.msra.mxu0 %v166
  %231 = vmatpush.bf16.msra.mxu0 %v162
  %232 = vmatpush.bf16.msra.mxu0 %v158
  %233 = vmatpush.bf16.msra.mxu0 %v154
  %234 = vmatpush.bf16.msra.mxu0 %v150
  %235 = vmatmul.bf16.gmra.mxu0 %v51
  %v236 = vpop.f32.mrf.mxu0
  %v237 = vadd.f32 0.0, %v236
  %v238 = vpop.f32.mrf.mxu0
  %v239 = vadd.f32 0.0, %v238
  %240 = vdwg.mxu0
  %241 = vmatpush.bf16.msra.mxu0 %v179
  %242 = vmatpush.bf16.msra.mxu0 %v175
  %243 = vmatpush.bf16.msra.mxu0 %v171
  %244 = vmatpush.bf16.msra.mxu0 %v167
  %245 = vmatpush.bf16.msra.mxu0 %v163
  %246 = vmatpush.bf16.msra.mxu0 %v159
  %247 = vmatpush.bf16.msra.mxu0 %v155
  %248 = vmatpush.bf16.msra.mxu0 %v151
  %249 = vmatmul.bf16.gmra.mxu0 %v51
  %v250 = vpop.f32.mrf.mxu0
  %v251 = vadd.f32 0.0, %v250
  %v252 = vpop.f32.mrf.mxu0
  %v253 = vadd.f32 0.0, %v252
  %254 = vdwg.mxu0
  %255 = vmatpush.bf16.msra.mxu0 %v180
  %256 = vmatpush.bf16.msra.mxu0 %v176
  %257 = vmatpush.bf16.msra.mxu0 %v172
  %258 = vmatpush.bf16.msra.mxu0 %v168
  %259 = vmatpush.bf16.msra.mxu0 %v164
  %260 = vmatpush.bf16.msra.mxu0 %v160
  %261 = vmatpush.bf16.msra.mxu0 %v156
  %262 = vmatpush.bf16.msra.mxu0 %v152
  %263 = vmatmul.bf16.gmra.mxu0 %v51
  %v264 = vpop.f32.mrf.mxu0
  %v265 = vadd.f32 0.0, %v264
  %v266 = vpop.f32.mrf.mxu0
  %v267 = vadd.f32 0.0, %v266
  %268 = vdwg.mxu0
  %v269 = vpack.c.bf16 %v237, %v223
  %v270 = vpack.c.bf16 %v265, %v251
  %v271 = vpack.c.bf16 %v239, %v225
  %v272 = vpack.c.bf16 %v267, %v253
  %273 = vst [vmem:[%s2] sm:$0xff] %v269
  %274 = vst [vmem:[%s2 + $0x8] sm:$0xff] %v270
  %275 = vst [vmem:[%s2 + $0x10] sm:$0xff] %v271
  %276 = vst [vmem:[%s2 + $0x18] sm:$0xff] %v272
  %v277 = vadd.f32 %v223, %v237
  %v278 = vadd.f32 %v277, %v251
  %v279 = vadd.f32 %v278, %v265
  %280 = vadd.xlane.f32.xlu0 %v279
  %v281 = vpop.xlane.xlu0 %280
  %v282 = vadd.f32 %v225, %v239
  %v283 = vadd.f32 %v282, %v253
  %v284 = vadd.f32 %v283, %v267
  %285 = vadd.xlane.f32.xlu0 %v284
  %v286 = vpop.xlane.xlu0 %285
  %v289 = vlaneseq
  %v290 = vand.u32 %v289, 127
  %v291 = vperm.slane %v281, %v290
  %v292 = vadd.s32 %v290, 4294967288
  %v293 = vperm.slane %v286, %v292
  %vm294 = vcmask 130112
  %v295 = vsel %vm294, %v293, %v291
  %vm297 = vcmask 122880
  %298 = vst.msk [vmem:[%s3] sm:$0x1] %vm297, %v295
  %v299 = vmul.f32 %v223, %v223
  %v300 = vmul.f32 %v237, %v237
  %v301 = vmul.f32 %v251, %v251
  %v302 = vmul.f32 %v265, %v265
  %v303 = vmul.f32 %v225, %v225
  %v304 = vmul.f32 %v239, %v239
  %v305 = vmul.f32 %v253, %v253
  %v306 = vmul.f32 %v267, %v267
  %v307 = vadd.f32 %v299, %v300
  %v308 = vadd.f32 %v307, %v301
  %v309 = vadd.f32 %v308, %v302
  %310 = vadd.xlane.f32.xlu0 %v309
  %v311 = vpop.xlane.xlu0 %310
  %v312 = vadd.f32 %v303, %v304
  %v313 = vadd.f32 %v312, %v305
  %v314 = vadd.f32 %v313, %v306
  %315 = vadd.xlane.f32.xlu0 %v314
  %v316 = vpop.xlane.xlu0 %315
  %v319 = vperm.slane %v311, %v290
  %v320 = vperm.slane %v316, %v292
  %v321 = vsel %vm294, %v320, %v319
  %323 = vst.msk [vmem:[%s3 + $0x1] sm:$0x1] %vm297, %v321
  // Predicated region
  $region10: #{discriminator_forward.5} parent=0 // pred_check
    _
  $region11: #{discriminator_forward.5} parent=0 // pred_check_branch
    %325 = sbr.rel (0) target = $region13
  $region12: #{discriminator_forward.5} parent=0 // pred_region
    _
  $region13: #{discriminator_forward.5} parent=0 // pred_fallthru
    _
  // Predicated region
  $region14: #{discriminator_forward.5} parent=0 // pred_check
    _
  $region15: #{discriminator_forward.5} parent=0 // pred_check_branch
    %327 = sbr.rel (0) target = $region17
  $region16: #{discriminator_forward.5} parent=0 // pred_region
    _
  $region17: #{discriminator_forward.5} parent=0 // pred_fallthru
    _
  // Predicated region
  $region18: #{discriminator_forward.5} parent=0 // pred_check
    _
  $region19: #{discriminator_forward.5} parent=0 // pred_check_branch
    %329 = sbr.rel (0) target = $region21
  $region20: #{discriminator_forward.5} parent=0 // pred_region
    _
  $region21: #{discriminator_forward.5} parent=0 // pred_fallthru
    _
  // Predicated region
  $region22: #{discriminator_forward.5} parent=0 // pred_check
    _
  $region23: #{discriminator_forward.5} parent=0 // pred_check_branch
    %331 = sbr.rel (0) target = $region25
  $region24: #{discriminator_forward.5} parent=0 // pred_region
    _
  $region25: #{discriminator_forward.5} parent=0 // pred_fallthru
    _

// kernel: discriminator_forward.6
$region0: #{discriminator_forward.6}
  #allocation0 [shape = 'u32[]', space=smem, size = 0x4, offset = 0x4, fixed_abs, tag = 'smem constant byte address 0x4 - core index']
  #allocation1 [shape = 'u32[72,128]{1,0:T(1,128)}', space=vmem, size = 0x9000, scoped, tag = 'internal scratch']
  %s0 = inlined_call_operand.vmem [shape: bf16[256,128], index: 0, kind: input, shape index: {}]
  %s1 = inlined_call_operand.vmem [shape: bf16[32,256], index: 1, kind: input, shape index: {}]
  %s2 = inlined_call_operand.vmem [shape: bf16[32,128], index: 2, kind: output, shape index: {0}]
  %s3 = inlined_call_operand.vmem [shape: f32[1,2,32], index: 3, kind: output, shape index: {1}]
  %4 = xla_tuple %s2, %s3
  %s5 = sld [smem:[#allocation0]]
  $region26: #{discriminator_forward.6} parent=0
    _
  %s7 = ssub.s32 1, %s5
  %s8 = scalar_select 0, %s7, %s5
  // Predicated region
  $region2: #{discriminator_forward.6} parent=0 // pred_check
    _
  $region3: #{discriminator_forward.6} parent=0 // pred_check_branch
    %10 = sbr.rel (0) target = $region5
  $region4: #{discriminator_forward.6} parent=0 // pred_region
    _
  $region5: #{discriminator_forward.6} parent=0 // pred_fallthru
    _
  // Predicated region
  $region6: #{discriminator_forward.6} parent=0 // pred_check
    _
  $region7: #{discriminator_forward.6} parent=0 // pred_check_branch
    %12 = sbr.rel (0) target = $region9
  $region8: #{discriminator_forward.6} parent=0 // pred_region
    _
  $region9: #{discriminator_forward.6} parent=0 // pred_fallthru
    _
  %v13 = vld [vmem:[%s1] sm:$0xff]
  %v14 = vld [vmem:[%s1 + $0x8] sm:$0xff]
  %v15 = vld [vmem:[%s1 + $0x10] sm:$0xff]
  %v16 = vld [vmem:[%s1 + $0x18] sm:$0xff]
  %v17 = vld [vmem:[%s0] sm:$0xf]
  %v18 = vld [vmem:[%s0 + $0x4] sm:$0xf]
  %v19 = vld [vmem:[%s0 + $0x8] sm:$0xf]
  %v20 = vld [vmem:[%s0 + $0xc] sm:$0xf]
  %v21 = vld [vmem:[%s0 + $0x10] sm:$0xf]
  %v22 = vld [vmem:[%s0 + $0x14] sm:$0xf]
  %v23 = vld [vmem:[%s0 + $0x18] sm:$0xf]
  %v24 = vld [vmem:[%s0 + $0x1c] sm:$0xf]
  %v25 = vld [vmem:[%s0 + $0x20] sm:$0xf]
  %v26 = vld [vmem:[%s0 + $0x24] sm:$0xf]
  %v27 = vld [vmem:[%s0 + $0x28] sm:$0xf]
  %v28 = vld [vmem:[%s0 + $0x2c] sm:$0xf]
  %v29 = vld [vmem:[%s0 + $0x30] sm:$0xf]
  %v30 = vld [vmem:[%s0 + $0x34] sm:$0xf]
  %v31 = vld [vmem:[%s0 + $0x38] sm:$0xf]
  %v32 = vld [vmem:[%s0 + $0x3c] sm:$0xf]
  %v33 = vld [vmem:[%s0 + $0x40] sm:$0xf]
  %v34 = vld [vmem:[%s0 + $0x44] sm:$0xf]
  %v35 = vld [vmem:[%s0 + $0x48] sm:$0xf]
  %v36 = vld [vmem:[%s0 + $0x4c] sm:$0xf]
  %v37 = vld [vmem:[%s0 + $0x50] sm:$0xf]
  %v38 = vld [vmem:[%s0 + $0x54] sm:$0xf]
  %v39 = vld [vmem:[%s0 + $0x58] sm:$0xf]
  %v40 = vld [vmem:[%s0 + $0x5c] sm:$0xf]
  %v41 = vld [vmem:[%s0 + $0x60] sm:$0xf]
  %v42 = vld [vmem:[%s0 + $0x64] sm:$0xf]
  %v43 = vld [vmem:[%s0 + $0x68] sm:$0xf]
  %v44 = vld [vmem:[%s0 + $0x6c] sm:$0xf]
  %v45 = vld [vmem:[%s0 + $0x70] sm:$0xf]
  %v46 = vld [vmem:[%s0 + $0x74] sm:$0xf]
  %v47 = vld [vmem:[%s0 + $0x78] sm:$0xf]
  %v48 = vld [vmem:[%s0 + $0x7c] sm:$0xf]
  %v53 = vunpack.c.l.b16 %v13
  %v54 = vunpack.c.h.b16 %v13
  %v55 = vunpack.c.l.b16 %v14
  %v56 = vunpack.c.h.b16 %v14
  %v57 = vunpack.c.l.b16 %v15
  %v58 = vunpack.c.h.b16 %v15
  %v59 = vunpack.c.l.b16 %v16
  %v60 = vunpack.c.h.b16 %v16
  %v61 = vpack.c.b16 %v55, %v53
  %v62 = vpack.c.b16 %v56, %v54
  %v63 = vpack.c.b16 %v59, %v57
  %v64 = vpack.c.b16 %v60, %v58
  %v101 = vunpack.c.l.b16 %v17
  %v102 = vunpack.c.l.b16 %v18
  %v103 = vunpack.c.l.b16 %v19
  %v104 = vunpack.c.l.b16 %v20
  %v105 = vunpack.c.l.b16 %v21
  %v106 = vunpack.c.l.b16 %v22
  %v107 = vunpack.c.l.b16 %v23
  %v108 = vunpack.c.l.b16 %v24
  %v109 = vunpack.c.l.b16 %v25
  %v110 = vunpack.c.l.b16 %v26
  %v111 = vunpack.c.l.b16 %v27
  %v112 = vunpack.c.l.b16 %v28
  %v113 = vunpack.c.l.b16 %v29
  %v114 = vunpack.c.l.b16 %v30
  %v115 = vunpack.c.l.b16 %v31
  %v116 = vunpack.c.l.b16 %v32
  %v117 = vunpack.c.l.b16 %v33
  %v118 = vunpack.c.l.b16 %v34
  %v119 = vunpack.c.l.b16 %v35
  %v120 = vunpack.c.l.b16 %v36
  %v121 = vunpack.c.l.b16 %v37
  %v122 = vunpack.c.l.b16 %v38
  %v123 = vunpack.c.l.b16 %v39
  %v124 = vunpack.c.l.b16 %v40
  %v125 = vunpack.c.l.b16 %v41
  %v126 = vunpack.c.l.b16 %v42
  %v127 = vunpack.c.l.b16 %v43
  %v128 = vunpack.c.l.b16 %v44
  %v129 = vunpack.c.l.b16 %v45
  %v130 = vunpack.c.l.b16 %v46
  %v131 = vunpack.c.l.b16 %v47
  %v132 = vunpack.c.l.b16 %v48
  %v133 = vpack.c.b16 %v102, %v101
  %v134 = vpack.c.b16 %v104, %v103
  %v135 = vpack.c.b16 %v106, %v105
  %v136 = vpack.c.b16 %v108, %v107
  %v137 = vpack.c.b16 %v110, %v109
  %v138 = vpack.c.b16 %v112, %v111
  %v139 = vpack.c.b16 %v114, %v113
  %v140 = vpack.c.b16 %v116, %v115
  %v141 = vpack.c.b16 %v118, %v117
  %v142 = vpack.c.b16 %v120, %v119
  %v143 = vpack.c.b16 %v122, %v121
  %v144 = vpack.c.b16 %v124, %v123
  %v145 = vpack.c.b16 %v126, %v125
  %v146 = vpack.c.b16 %v128, %v127
  %v147 = vpack.c.b16 %v130, %v129
  %v148 = vpack.c.b16 %v132, %v131
  %165 = vmatpush.bf16.msra.mxu0 %v140
  %166 = vmatpush.bf16.msra.mxu0 %v139
  %167 = vmatpush.bf16.msra.mxu0 %v138
  %168 = vmatpush.bf16.msra.mxu0 %v137
  %169 = vmatpush.bf16.msra.mxu0 %v136
  %170 = vmatpush.bf16.msra.mxu0 %v135
  %171 = vmatpush.bf16.msra.mxu0 %v134
  %172 = vmatpush.bf16.msra.mxu0 %v133
  %173 = vmatmul.bf16.gmra.mxu0 %v61
  %v174 = vpop.f32.mrf.mxu0
  %v175 = vadd.f32 0.0, %v174
  %v176 = vpop.f32.mrf.mxu0
  %v177 = vadd.f32 0.0, %v176
  %178 = vmatmul.bf16.gmra.mxu0 %v63
  %v179 = vpop.f32.mrf.mxu0
  %v180 = vadd.f32 0.0, %v179
  %v181 = vpop.f32.mrf.mxu0
  %v182 = vadd.f32 0.0, %v181
  %183 = vdwg.mxu0
  %184 = vmatpush.bf16.msra.mxu0 %v148
  %185 = vmatpush.bf16.msra.mxu0 %v147
  %186 = vmatpush.bf16.msra.mxu0 %v146
  %187 = vmatpush.bf16.msra.mxu0 %v145
  %188 = vmatpush.bf16.msra.mxu0 %v144
  %189 = vmatpush.bf16.msra.mxu0 %v143
  %190 = vmatpush.bf16.msra.mxu0 %v142
  %191 = vmatpush.bf16.msra.mxu0 %v141
  %192 = vmatmul.bf16.gmra.mxu0 %v62
  %v193 = vpop.f32.mrf.mxu0
  %v194 = vadd.f32 %v175, %v193
  %v195 = vpop.f32.mrf.mxu0
  %v196 = vadd.f32 %v177, %v195
  %197 = vmatmul.bf16.gmra.mxu0 %v64
  %v198 = vpop.f32.mrf.mxu0
  %v199 = vadd.f32 %v180, %v198
  %v200 = vpop.f32.mrf.mxu0
  %v201 = vadd.f32 %v182, %v200
  %202 = vdwg.mxu0
  %v203 = vpack.c.bf16 %v194, %v194
  %v204 = vpack.c.bf16 %v196, %v196
  %v205 = vpack.c.bf16 %v199, %v199
  %v206 = vpack.c.bf16 %v201, %v201
  %207 = vst [vmem:[%s2] sm:$0xf] %v203
  %208 = vst [vmem:[%s2 + $0x4] sm:$0xf] %v204
  %209 = vst [vmem:[%s2 + $0x8] sm:$0xf] %v205
  %210 = vst [vmem:[%s2 + $0xc] sm:$0xf] %v206
  %211 = vadd.xlane.f32.xlu0 %v194
  %v212 = vpop.xlane.xlu0 %211
  %213 = vadd.xlane.f32.xlu0 %v196
  %v214 = vpop.xlane.xlu0 %213
  %215 = vadd.xlane.f32.xlu0 %v199
  %v216 = vpop.xlane.xlu0 %215
  %217 = vadd.xlane.f32.xlu0 %v201
  %v218 = vpop.xlane.xlu0 %217
  %v223 = vlaneseq
  %v224 = vand.u32 %v223, 127
  %v225 = vperm.slane %v212, %v224
  %v226 = vadd.s32 %v224, 4294967288
  %v227 = vperm.slane %v214, %v226
  %vm228 = vcmask 130112
  %v229 = vsel %vm228, %v227, %v225
  %v230 = vadd.s32 %v224, 4294967280
  %v231 = vperm.slane %v216, %v230
  %vm232 = vcmask 195712
  %v233 = vsel %vm232, %v231, %v229
  %v234 = vadd.s32 %v224, 4294967272
  %v235 = vperm.slane %v218, %v234
  %vm236 = vcmask 261312
  %v237 = vsel %vm236, %v235, %v233
  %vm239 = vcmask 253952
  %240 = vst.msk [vmem:[%s3] sm:$0x1] %vm239, %v237
  %v241 = vmul.f32 %v194, %v194
  %v242 = vmul.f32 %v196, %v196
  %v243 = vmul.f32 %v199, %v199
  %v244 = vmul.f32 %v201, %v201
  %245 = vadd.xlane.f32.xlu0 %v241
  %v246 = vpop.xlane.xlu0 %245
  %247 = vadd.xlane.f32.xlu0 %v242
  %v248 = vpop.xlane.xlu0 %247
  %249 = vadd.xlane.f32.xlu0 %v243
  %v250 = vpop.xlane.xlu0 %249
  %251 = vadd.xlane.f32.xlu0 %v244
  %v252 = vpop.xlane.xlu0 %251
  %v257 = vperm.slane %v246, %v224
  %v258 = vperm.slane %v248, %v226
  %v259 = vsel %vm228, %v258, %v257
  %v260 = vperm.slane %v250, %v230
  %v261 = vsel %vm232, %v260, %v259
  %v262 = vperm.slane %v252, %v234
  %v263 = vsel %vm236, %v262, %v261
  %265 = vst.msk [vmem:[%s3 + $0x1] sm:$0x1] %vm239, %v263
  // Predicated region
  $region10: #{discriminator_forward.6} parent=0 // pred_check
    _
  $region11: #{discriminator_forward.6} parent=0 // pred_check_branch
    %267 = sbr.rel (0) target = $region13
  $region12: #{discriminator_forward.6} parent=0 // pred_region
    _
  $region13: #{discriminator_forward.6} parent=0 // pred_fallthru
    _
  // Predicated region
  $region14: #{discriminator_forward.6} parent=0 // pred_check
    _
  $region15: #{discriminator_forward.6} parent=0 // pred_check_branch
    %269 = sbr.rel (0) target = $region17
  $region16: #{discriminator_forward.6} parent=0 // pred_region
    _
  $region17: #{discriminator_forward.6} parent=0 // pred_fallthru
    _
  // Predicated region
  $region18: #{discriminator_forward.6} parent=0 // pred_check
    _
  $region19: #{discriminator_forward.6} parent=0 // pred_check_branch
    %271 = sbr.rel (0) target = $region21
  $region20: #{discriminator_forward.6} parent=0 // pred_region
    _
  $region21: #{discriminator_forward.6} parent=0 // pred_fallthru
    _
  // Predicated region
  $region22: #{discriminator_forward.6} parent=0 // pred_check
    _
  $region23: #{discriminator_forward.6} parent=0 // pred_check_branch
    %273 = sbr.rel (0) target = $region25
  $region24: #{discriminator_forward.6} parent=0 // pred_region
    _
  $region25: #{discriminator_forward.6} parent=0 // pred_fallthru
    _

// kernel: discriminator_forward.7
$region0: #{discriminator_forward.7}
  #allocation0 [shape = 'u32[]', space=smem, size = 0x4, offset = 0x4, fixed_abs, tag = 'smem constant byte address 0x4 - core index']
  #allocation1 [shape = 'u32[72,128]{1,0:T(1,128)}', space=vmem, size = 0x9000, scoped, tag = 'internal scratch']
  %s0 = inlined_call_operand.vmem [shape: bf16[512,128], index: 0, kind: input, shape index: {}]
  %s1 = inlined_call_operand.vmem [shape: bf16[64,512], index: 1, kind: input, shape index: {}]
  %s2 = inlined_call_operand.vmem [shape: bf16[64,128], index: 2, kind: output, shape index: {0}]
  %s3 = inlined_call_operand.vmem [shape: f32[1,2,64], index: 3, kind: output, shape index: {1}]
  %4 = xla_tuple %s2, %s3
  %s5 = sld [smem:[#allocation0]]
  $region26: #{discriminator_forward.7} parent=0
    _
  %s7 = ssub.s32 1, %s5
  %s8 = scalar_select 0, %s7, %s5
  // Predicated region
  $region2: #{discriminator_forward.7} parent=0 // pred_check
    _
  $region3: #{discriminator_forward.7} parent=0 // pred_check_branch
    %10 = sbr.rel (0) target = $region5
  $region4: #{discriminator_forward.7} parent=0 // pred_region
    _
  $region5: #{discriminator_forward.7} parent=0 // pred_fallthru
    _
  // Predicated region
  $region6: #{discriminator_forward.7} parent=0 // pred_check
    _
  $region7: #{discriminator_forward.7} parent=0 // pred_check_branch
    %12 = sbr.rel (0) target = $region9
  $region8: #{discriminator_forward.7} parent=0 // pred_region
    _
  $region9: #{discriminator_forward.7} parent=0 // pred_fallthru
    _
  %v13 = vld [vmem:[%s1] sm:$0xff]
  %v14 = vld [vmem:[%s1 + $0x8] sm:$0xff]
  %v15 = vld [vmem:[%s1 + $0x10] sm:$0xff]
  %v16 = vld [vmem:[%s1 + $0x18] sm:$0xff]
  %v17 = vld [vmem:[%s1 + $0x20] sm:$0xff]
  %v18 = vld [vmem:[%s1 + $0x28] sm:$0xff]
  %v19 = vld [vmem:[%s1 + $0x30] sm:$0xff]
  %v20 = vld [vmem:[%s1 + $0x38] sm:$0xff]
  %v21 = vld [vmem:[%s1 + $0x40] sm:$0xff]
  %v22 = vld [vmem:[%s1 + $0x48] sm:$0xff]
  %v23 = vld [vmem:[%s1 + $0x50] sm:$0xff]
  %v24 = vld [vmem:[%s1 + $0x58] sm:$0xff]
  %v25 = vld [vmem:[%s1 + $0x60] sm:$0xff]
  %v26 = vld [vmem:[%s1 + $0x68] sm:$0xff]
  %v27 = vld [vmem:[%s1 + $0x70] sm:$0xff]
  %v28 = vld [vmem:[%s1 + $0x78] sm:$0xff]
  %v29 = vld [vmem:[%s0] sm:$0xf]
  %v30 = vld [vmem:[%s0 + $0x4] sm:$0xf]
  %v31 = vld [vmem:[%s0 + $0x8] sm:$0xf]
  %v32 = vld [vmem:[%s0 + $0xc] sm:$0xf]
  %v33 = vld [vmem:[%s0 + $0x10] sm:$0xf]
  %v34 = vld [vmem:[%s0 + $0x14] sm:$0xf]
  %v35 = vld [vmem:[%s0 + $0x18] sm:$0xf]
  %v36 = vld [vmem:[%s0 + $0x1c] sm:$0xf]
  %v37 = vld [vmem:[%s0 + $0x20] sm:$0xf]
  %v38 = vld [vmem:[%s0 + $0x24] sm:$0xf]
  %v39 = vld [vmem:[%s0 + $0x28] sm:$0xf]
  %v40 = vld [vmem:[%s0 + $0x2c] sm:$0xf]
  %v41 = vld [vmem:[%s0 + $0x30] sm:$0xf]
  %v42 = vld [vmem:[%s0 + $0x34] sm:$0xf]
  %v43 = vld [vmem:[%s0 + $0x38] sm:$0xf]
  %v44 = vld [vmem:[%s0 + $0x3c] sm:$0xf]
  %v45 = vld [vmem:[%s0 + $0x40] sm:$0xf]
  %v46 = vld [vmem:[%s0 + $0x44] sm:$0xf]
  %v47 = vld [vmem:[%s0 + $0x48] sm:$0xf]
  %v48 = vld [vmem:[%s0 + $0x4c] sm:$0xf]
  %v49 = vld [vmem:[%s0 + $0x50] sm:$0xf]
  %v50 = vld [vmem:[%s0 + $0x54] sm:$0xf]
  %v51 = vld [vmem:[%s0 + $0x58] sm:$0xf]
  %v52 = vld [vmem:[%s0 + $0x5c] sm:$0xf]
  %v53 = vld [vmem:[%s0 + $0x60] sm:$0xf]
  %v54 = vld [vmem:[%s0 + $0x64] sm:$0xf]
  %v55 = vld [vmem:[%s0 + $0x68] sm:$0xf]
  %v56 = vld [vmem:[%s0 + $0x6c] sm:$0xf]
  %v57 = vld [vmem:[%s0 + $0x70] sm:$0xf]
  %v58 = vld [vmem:[%s0 + $0x74] sm:$0xf]
  %v59 = vld [vmem:[%s0 + $0x78] sm:$0xf]
  %v60 = vld [vmem:[%s0 + $0x7c] sm:$0xf]
  %v61 = vld [vmem:[%s0 + $0x80] sm:$0xf]
  %v62 = vld [vmem:[%s0 + $0x84] sm:$0xf]
  %v63 = vld [vmem:[%s0 + $0x88] sm:$0xf]
  %v64 = vld [vmem:[%s0 + $0x8c] sm:$0xf]
  %v65 = vld [vmem:[%s0 + $0x90] sm:$0xf]
  %v66 = vld [vmem:[%s0 + $0x94] sm:$0xf]
  %v67 = vld [vmem:[%s0 + $0x98] sm:$0xf]
  %v68 = vld [vmem:[%s0 + $0x9c] sm:$0xf]
  %v69 = vld [vmem:[%s0 + $0xa0] sm:$0xf]
  %v70 = vld [vmem:[%s0 + $0xa4] sm:$0xf]
  %v71 = vld [vmem:[%s0 + $0xa8] sm:$0xf]
  %v72 = vld [vmem:[%s0 + $0xac] sm:$0xf]
  %v73 = vld [vmem:[%s0 + $0xb0] sm:$0xf]
  %v74 = vld [vmem:[%s0 + $0xb4] sm:$0xf]
  %v75 = vld [vmem:[%s0 + $0xb8] sm:$0xf]
  %v76 = vld [vmem:[%s0 + $0xbc] sm:$0xf]
  %v77 = vld [vmem:[%s0 + $0xc0] sm:$0xf]
  %v78 = vld [vmem:[%s0 + $0xc4] sm:$0xf]
  %v79 = vld [vmem:[%s0 + $0xc8] sm:$0xf]
  %v80 = vld [vmem:[%s0 + $0xcc] sm:$0xf]
  %v81 = vld [vmem:[%s0 + $0xd0] sm:$0xf]
  %v82 = vld [vmem:[%s0 + $0xd4] sm:$0xf]
  %v83 = vld [vmem:[%s0 + $0xd8] sm:$0xf]
  %v84 = vld [vmem:[%s0 + $0xdc] sm:$0xf]
  %v85 = vld [vmem:[%s0 + $0xe0] sm:$0xf]
  %v86 = vld [vmem:[%s0 + $0xe4] sm:$0xf]
  %v87 = vld [vmem:[%s0 + $0xe8] sm:$0xf]
  %v88 = vld [vmem:[%s0 + $0xec] sm:$0xf]
  %v89 = vld [vmem:[%s0 + $0xf0] sm:$0xf]
  %v90 = vld [vmem:[%s0 + $0xf4] sm:$0xf]
  %v91 = vld [vmem:[%s0 + $0xf8] sm:$0xf]
  %v92 = vld [vmem:[%s0 + $0xfc] sm:$0xf]
  %v109 = vunpack.c.l.b16 %v13
  %v110 = vunpack.c.h.b16 %v13
  %v111 = vunpack.c.l.b16 %v14
  %v112 = vunpack.c.h.b16 %v14
  %v113 = vunpack.c.l.b16 %v15
  %v114 = vunpack.c.h.b16 %v15
  %v115 = vunpack.c.l.b16 %v16
  %v116 = vunpack.c.h.b16 %v16
  %v117 = vunpack.c.l.b16 %v17
  %v118 = vunpack.c.h.b16 %v17
  %v119 = vunpack.c.l.b16 %v18
  %v120 = vunpack.c.h.b16 %v18
  %v121 = vunpack.c.l.b16 %v19
  %v122 = vunpack.c.h.b16 %v19
  %v123 = vunpack.c.l.b16 %v20
  %v124 = vunpack.c.h.b16 %v20
  %v125 = vunpack.c.l.b16 %v21
  %v126 = vunpack.c.h.b16 %v21
  %v127 = vunpack.c.l.b16 %v22
  %v128 = vunpack.c.h.b16 %v22
  %v129 = vunpack.c.l.b16 %v23
  %v130 = vunpack.c.h.b16 %v23
  %v131 = vunpack.c.l.b16 %v24
  %v132 = vunpack.c.h.b16 %v24
  %v133 = vunpack.c.l.b16 %v25
  %v134 = vunpack.c.h.b16 %v25
  %v135 = vunpack.c.l.b16 %v26
  %v136 = vunpack.c.h.b16 %v26
  %v137 = vunpack.c.l.b16 %v27
  %v138 = vunpack.c.h.b16 %v27
  %v139 = vunpack.c.l.b16 %v28
  %v140 = vunpack.c.h.b16 %v28
  %v141 = vpack.c.b16 %v113, %v109
  %v142 = vpack.c.b16 %v114, %v110
  %v143 = vpack.c.b16 %v115, %v111
  %v144 = vpack.c.b16 %v116, %v112
  %v145 = vpack.c.b16 %v121, %v117
  %v146 = vpack.c.b16 %v122, %v118
  %v147 = vpack.c.b16 %v123, %v119
  %v148 = vpack.c.b16 %v124, %v120
  %v149 = vpack.c.b16 %v129, %v125
  %v150 = vpack.c.b16 %v130, %v126
  %v151 = vpack.c.b16 %v131, %v127
  %v152 = vpack.c.b16 %v132, %v128
  %v153 = vpack.c.b16 %v137, %v133
  %v154 = vpack.c.b16 %v138, %v134
  %v155 = vpack.c.b16 %v139, %v135
  %v156 = vpack.c.b16 %v140, %v136
  %v237 = vunpack.c.l.b16 %v29
  %v238 = vunpack.c.l.b16 %v30
  %v239 = vunpack.c.l.b16 %v31
  %v240 = vunpack.c.l.b16 %v32
  %v241 = vunpack.c.l.b16 %v33
  %v242 = vunpack.c.l.b16 %v34
  %v243 = vunpack.c.l.b16 %v35
  %v244 = vunpack.c.l.b16 %v36
  %v245 = vunpack.c.l.b16 %v37
  %v246 = vunpack.c.l.b16 %v38
  %v247 = vunpack.c.l.b16 %v39
  %v248 = vunpack.c.l.b16 %v40
  %v249 = vunpack.c.l.b16 %v41
  %v250 = vunpack.c.l.b16 %v42
  %v251 = vunpack.c.l.b16 %v43
  %v252 = vunpack.c.l.b16 %v44
  %v253 = vunpack.c.l.b16 %v45
  %v254 = vunpack.c.l.b16 %v46
  %v255 = vunpack.c.l.b16 %v47
  %v256 = vunpack.c.l.b16 %v48
  %v257 = vunpack.c.l.b16 %v49
  %v258 = vunpack.c.l.b16 %v50
  %v259 = vunpack.c.l.b16 %v51
  %v260 = vunpack.c.l.b16 %v52
  %v261 = vunpack.c.l.b16 %v53
  %v262 = vunpack.c.l.b16 %v54
  %v263 = vunpack.c.l.b16 %v55
  %v264 = vunpack.c.l.b16 %v56
  %v265 = vunpack.c.l.b16 %v57
  %v266 = vunpack.c.l.b16 %v58
  %v267 = vunpack.c.l.b16 %v59
  %v268 = vunpack.c.l.b16 %v60
  %v269 = vunpack.c.l.b16 %v61
  %v270 = vunpack.c.l.b16 %v62
  %v271 = vunpack.c.l.b16 %v63
  %v272 = vunpack.c.l.b16 %v64
  %v273 = vunpack.c.l.b16 %v65
  %v274 = vunpack.c.l.b16 %v66
  %v275 = vunpack.c.l.b16 %v67
  %v276 = vunpack.c.l.b16 %v68
  %v277 = vunpack.c.l.b16 %v69
  %v278 = vunpack.c.l.b16 %v70
  %v279 = vunpack.c.l.b16 %v71
  %v280 = vunpack.c.l.b16 %v72
  %v281 = vunpack.c.l.b16 %v73
  %v282 = vunpack.c.l.b16 %v74
  %v283 = vunpack.c.l.b16 %v75
  %v284 = vunpack.c.l.b16 %v76
  %v285 = vunpack.c.l.b16 %v77
  %v286 = vunpack.c.l.b16 %v78
  %v287 = vunpack.c.l.b16 %v79
  %v288 = vunpack.c.l.b16 %v80
  %v289 = vunpack.c.l.b16 %v81
  %v290 = vunpack.c.l.b16 %v82
  %v291 = vunpack.c.l.b16 %v83
  %v292 = vunpack.c.l.b16 %v84
  %v293 = vunpack.c.l.b16 %v85
  %v294 = vunpack.c.l.b16 %v86
  %v295 = vunpack.c.l.b16 %v87
  %v296 = vunpack.c.l.b16 %v88
  %v297 = vunpack.c.l.b16 %v89
  %v298 = vunpack.c.l.b16 %v90
  %v299 = vunpack.c.l.b16 %v91
  %v300 = vunpack.c.l.b16 %v92
  %v301 = vpack.c.b16 %v238, %v237
  %v302 = vpack.c.b16 %v240, %v239
  %v303 = vpack.c.b16 %v242, %v241
  %v304 = vpack.c.b16 %v244, %v243
  %v305 = vpack.c.b16 %v246, %v245
  %v306 = vpack.c.b16 %v248, %v247
  %v307 = vpack.c.b16 %v250, %v249
  %v308 = vpack.c.b16 %v252, %v251
  %v309 = vpack.c.b16 %v254, %v253
  %v310 = vpack.c.b16 %v256, %v255
  %v311 = vpack.c.b16 %v258, %v257
  %v312 = vpack.c.b16 %v260, %v259
  %v313 = vpack.c.b16 %v262, %v261
  %v314 = vpack.c.b16 %v264, %v263
  %v315 = vpack.c.b16 %v266, %v265
  %v316 = vpack.c.b16 %v268, %v267
  %v317 = vpack.c.b16 %v270, %v269
  %v318 = vpack.c.b16 %v272, %v271
  %v319 = vpack.c.b16 %v274, %v273
  %v320 = vpack.c.b16 %v276, %v275
  %v321 = vpack.c.b16 %v278, %v277
  %v322 = vpack.c.b16 %v280, %v279
  %v323 = vpack.c.b16 %v282, %v281
  %v324 = vpack.c.b16 %v284, %v283
  %v325 = vpack.c.b16 %v286, %v285
  %v326 = vpack.c.b16 %v288, %v287
  %v327 = vpack.c.b16 %v290, %v289
  %v328 = vpack.c.b16 %v292, %v291
  %v329 = vpack.c.b16 %v294, %v293
  %v330 = vpack.c.b16 %v296, %v295
  %v331 = vpack.c.b16 %v298, %v297
  %v332 = vpack.c.b16 %v300, %v299
  %365 = vmatpush.bf16.msra.mxu0 %v308
  %366 = vmatpush.bf16.msra.mxu0 %v307
  %367 = vmatpush.bf16.msra.mxu0 %v306
  %368 = vmatpush.bf16.msra.mxu0 %v305
  %369 = vmatpush.bf16.msra.mxu0 %v304
  %370 = vmatpush.bf16.msra.mxu0 %v303
  %371 = vmatpush.bf16.msra.mxu0 %v302
  %372 = vmatpush.bf16.msra.mxu0 %v301
  %373 = vmatmul.bf16.gmra.mxu0 %v141
  %v374 = vpop.f32.mrf.mxu0
  %v375 = vadd.f32 0.0, %v374
  %v376 = vpop.f32.mrf.mxu0
  %v377 = vadd.f32 0.0, %v376
  %378 = vmatmul.bf16.gmra.mxu0 %v145
  %v379 = vpop.f32.mrf.mxu0
  %v380 = vadd.f32 0.0, %v379
  %v381 = vpop.f32.mrf.mxu0
  %v382 = vadd.f32 0.0, %v381
  %383 = vmatmul.bf16.gmra.mxu0 %v149
  %v384 = vpop.f32.mrf.mxu0
  %v385 = vadd.f32 0.0, %v384
  %v386 = vpop.f32.mrf.mxu0
  %v387 = vadd.f32 0.0, %v386
  %388 = vmatmul.bf16.gmra.mxu0 %v153
  %v389 = vpop.f32.mrf.mxu0
  %v390 = vadd.f32 0.0, %v389
  %v391 = vpop.f32.mrf.mxu0
  %v392 = vadd.f32 0.0, %v391
  %393 = vdwg.mxu0
  %394 = vmatpush.bf16.msra.mxu0 %v316
  %395 = vmatpush.bf16.msra.mxu0 %v315
  %396 = vmatpush.bf16.msra.mxu0 %v314
  %397 = vmatpush.bf16.msra.mxu0 %v313
  %398 = vmatpush.bf16.msra.mxu0 %v312
  %399 = vmatpush.bf16.msra.mxu0 %v311
  %400 = vmatpush.bf16.msra.mxu0 %v310
  %401 = vmatpush.bf16.msra.mxu0 %v309
  %402 = vmatmul.bf16.gmra.mxu0 %v142
  %v403 = vpop.f32.mrf.mxu0
  %v404 = vadd.f32 %v375, %v403
  %v405 = vpop.f32.mrf.mxu0
  %v406 = vadd.f32 %v377, %v405
  %407 = vmatmul.bf16.gmra.mxu0 %v146
  %v408 = vpop.f32.mrf.mxu0
  %v409 = vadd.f32 %v380, %v408
  %v410 = vpop.f32.mrf.mxu0
  %v411 = vadd.f32 %v382, %v410
  %412 = vmatmul.bf16.gmra.mxu0 %v150
  %v413 = vpop.f32.mrf.mxu0
  %v414 = vadd.f32 %v385, %v413
  %v415 = vpop.f32.mrf.mxu0
  %v416 = vadd.f32 %v387, %v415
  %417 = vmatmul.bf16.gmra.mxu0 %v154
  %v418 = vpop.f32.mrf.mxu0
  %v419 = vadd.f32 %v390, %v418
  %v420 = vpop.f32.mrf.mxu0
  %v421 = vadd.f32 %v392, %v420
  %422 = vdwg.mxu0
  %423 = vmatpush.bf16.msra.mxu0 %v324
  %424 = vmatpush.bf16.msra.mxu0 %v323
  %425 = vmatpush.bf16.msra.mxu0 %v322
  %426 = vmatpush.bf16.msra.mxu0 %v321
  %427 = vmatpush.bf16.msra.mxu0 %v320
  %428 = vmatpush.bf16.msra.mxu0 %v319
  %429 = vmatpush.bf16.msra.mxu0 %v318
  %430 = vmatpush.bf16.msra.mxu0 %v317
  %431 = vmatmul.bf16.gmra.mxu0 %v143
  %v432 = vpop.f32.mrf.mxu0
  %v433 = vadd.f32 %v404, %v432
  %v434 = vpop.f32.mrf.mxu0
  %v435 = vadd.f32 %v406, %v434
  %436 = vmatmul.bf16.gmra.mxu0 %v147
  %v437 = vpop.f32.mrf.mxu0
  %v438 = vadd.f32 %v409, %v437
  %v439 = vpop.f32.mrf.mxu0
  %v440 = vadd.f32 %v411, %v439
  %441 = vmatmul.bf16.gmra.mxu0 %v151
  %v442 = vpop.f32.mrf.mxu0
  %v443 = vadd.f32 %v414, %v442
  %v444 = vpop.f32.mrf.mxu0
  %v445 = vadd.f32 %v416, %v444
  %446 = vmatmul.bf16.gmra.mxu0 %v155
  %v447 = vpop.f32.mrf.mxu0
  %v448 = vadd.f32 %v419, %v447
  %v449 = vpop.f32.mrf.mxu0
  %v450 = vadd.f32 %v421, %v449
  %451 = vdwg.mxu0
  %452 = vmatpush.bf16.msra.mxu0 %v332
  %453 = vmatpush.bf16.msra.mxu0 %v331
  %454 = vmatpush.bf16.msra.mxu0 %v330
  %455 = vmatpush.bf16.msra.mxu0 %v329
  %456 = vmatpush.bf16.msra.mxu0 %v328
  %457 = vmatpush.bf16.msra.mxu0 %v327
  %458 = vmatpush.bf16.msra.mxu0 %v326
  %459 = vmatpush.bf16.msra.mxu0 %v325
  %460 = vmatmul.bf16.gmra.mxu0 %v144
  %v461 = vpop.f32.mrf.mxu0
  %v462 = vadd.f32 %v433, %v461
  %v463 = vpop.f32.mrf.mxu0
  %v464 = vadd.f32 %v435, %v463
  %465 = vmatmul.bf16.gmra.mxu0 %v148
  %v466 = vpop.f32.mrf.mxu0
  %v467 = vadd.f32 %v438, %v466
  %v468 = vpop.f32.mrf.mxu0
  %v469 = vadd.f32 %v440, %v468
  %470 = vmatmul.bf16.gmra.mxu0 %v152
  %v471 = vpop.f32.mrf.mxu0
  %v472 = vadd.f32 %v443, %v471
  %v473 = vpop.f32.mrf.mxu0
  %v474 = vadd.f32 %v445, %v473
  %475 = vmatmul.bf16.gmra.mxu0 %v156
  %v476 = vpop.f32.mrf.mxu0
  %v477 = vadd.f32 %v448, %v476
  %v478 = vpop.f32.mrf.mxu0
  %v479 = vadd.f32 %v450, %v478
  %480 = vdwg.mxu0
  %v481 = vpack.c.bf16 %v462, %v462
  %v482 = vpack.c.bf16 %v464, %v464
  %v483 = vpack.c.bf16 %v467, %v467
  %v484 = vpack.c.bf16 %v469, %v469
  %v485 = vpack.c.bf16 %v472, %v472
  %v486 = vpack.c.bf16 %v474, %v474
  %v487 = vpack.c.bf16 %v477, %v477
  %v488 = vpack.c.bf16 %v479, %v479
  %489 = vst [vmem:[%s2] sm:$0xf] %v481
  %490 = vst [vmem:[%s2 + $0x4] sm:$0xf] %v482
  %491 = vst [vmem:[%s2 + $0x8] sm:$0xf] %v483
  %492 = vst [vmem:[%s2 + $0xc] sm:$0xf] %v484
  %493 = vst [vmem:[%s2 + $0x10] sm:$0xf] %v485
  %494 = vst [vmem:[%s2 + $0x14] sm:$0xf] %v486
  %495 = vst [vmem:[%s2 + $0x18] sm:$0xf] %v487
  %496 = vst [vmem:[%s2 + $0x1c] sm:$0xf] %v488
  %497 = vadd.xlane.f32.xlu0 %v462
  %v498 = vpop.xlane.xlu0 %497
  %499 = vadd.xlane.f32.xlu0 %v464
  %v500 = vpop.xlane.xlu0 %499
  %501 = vadd.xlane.f32.xlu0 %v467
  %v502 = vpop.xlane.xlu0 %501
  %503 = vadd.xlane.f32.xlu0 %v469
  %v504 = vpop.xlane.xlu0 %503
  %505 = vadd.xlane.f32.xlu0 %v472
  %v506 = vpop.xlane.xlu0 %505
  %507 = vadd.xlane.f32.xlu0 %v474
  %v508 = vpop.xlane.xlu0 %507
  %509 = vadd.xlane.f32.xlu0 %v477
  %v510 = vpop.xlane.xlu0 %509
  %511 = vadd.xlane.f32.xlu0 %v479
  %v512 = vpop.xlane.xlu0 %511
  %v521 = vlaneseq
  %v522 = vand.u32 %v521, 127
  %v523 = vperm.slane %v498, %v522
  %v524 = vadd.s32 %v522, 4294967288
  %v525 = vperm.slane %v500, %v524
  %vm526 = vcmask 130112
  %v527 = vsel %vm526, %v525, %v523
  %v528 = vadd.s32 %v522, 4294967280
  %v529 = vperm.slane %v502, %v528
  %vm530 = vcmask 195712
  %v531 = vsel %vm530, %v529, %v527
  %v532 = vadd.s32 %v522, 4294967272
  %v533 = vperm.slane %v504, %v532
  %vm534 = vcmask 261312
  %v535 = vsel %vm534, %v533, %v531
  %v536 = vadd.s32 %v522, 4294967264
  %v537 = vperm.slane %v506, %v536
  %vm538 = vcmask 326912
  %v539 = vsel %vm538, %v537, %v535
  %v540 = vadd.s32 %v522, 4294967256
  %v541 = vperm.slane %v508, %v540
  %vm542 = vcmask 392512
  %v543 = vsel %vm542, %v541, %v539
  %v544 = vadd.s32 %v522, 4294967248
  %v545 = vperm.slane %v510, %v544
  %vm546 = vcmask 458112
  %v547 = vsel %vm546, %v545, %v543
  %v548 = vadd.s32 %v522, 4294967240
  %v549 = vperm.slane %v512, %v548
  %vm550 = vcmask 523712
  %v551 = vsel %vm550, %v549, %v547
  %vm553 = vcmask 516096
  %554 = vst.msk [vmem:[%s3] sm:$0x1] %vm553, %v551
  %v555 = vmul.f32 %v462, %v462
  %v556 = vmul.f32 %v464, %v464
  %v557 = vmul.f32 %v467, %v467
  %v558 = vmul.f32 %v469, %v469
  %v559 = vmul.f32 %v472, %v472
  %v560 = vmul.f32 %v474, %v474
  %v561 = vmul.f32 %v477, %v477
  %v562 = vmul.f32 %v479, %v479
  %563 = vadd.xlane.f32.xlu0 %v555
  %v564 = vpop.xlane.xlu0 %563
  %565 = vadd.xlane.f32.xlu0 %v556
  %v566 = vpop.xlane.xlu0 %565
  %567 = vadd.xlane.f32.xlu0 %v557
  %v568 = vpop.xlane.xlu0 %567
  %569 = vadd.xlane.f32.xlu0 %v558
  %v570 = vpop.xlane.xlu0 %569
  %571 = vadd.xlane.f32.xlu0 %v559
  %v572 = vpop.xlane.xlu0 %571
  %573 = vadd.xlane.f32.xlu0 %v560
  %v574 = vpop.xlane.xlu0 %573
  %575 = vadd.xlane.f32.xlu0 %v561
  %v576 = vpop.xlane.xlu0 %575
  %577 = vadd.xlane.f32.xlu0 %v562
  %v578 = vpop.xlane.xlu0 %577
  %v587 = vperm.slane %v564, %v522
  %v588 = vperm.slane %v566, %v524
  %v589 = vsel %vm526, %v588, %v587
  %v590 = vperm.slane %v568, %v528
  %v591 = vsel %vm530, %v590, %v589
  %v592 = vperm.slane %v570, %v532
  %v593 = vsel %vm534, %v592, %v591
  %v594 = vperm.slane %v572, %v536
  %v595 = vsel %vm538, %v594, %v593
  %v596 = vperm.slane %v574, %v540
  %v597 = vsel %vm542, %v596, %v595
  %v598 = vperm.slane %v576, %v544
  %v599 = vsel %vm546, %v598, %v597
  %v600 = vperm.slane %v578, %v548
  %v601 = vsel %vm550, %v600, %v599
  %603 = vst.msk [vmem:[%s3 + $0x1] sm:$0x1] %vm553, %v601
  // Predicated region
  $region10: #{discriminator_forward.7} parent=0 // pred_check
    _
  $region11: #{discriminator_forward.7} parent=0 // pred_check_branch
    %605 = sbr.rel (0) target = $region13
  $region12: #{discriminator_forward.7} parent=0 // pred_region
    _
  $region13: #{discriminator_forward.7} parent=0 // pred_fallthru
    _
  // Predicated region
  $region14: #{discriminator_forward.7} parent=0 // pred_check
    _
  $region15: #{discriminator_forward.7} parent=0 // pred_check_branch
    %607 = sbr.rel (0) target = $region17
  $region16: #{discriminator_forward.7} parent=0 // pred_region
    _
  $region17: #{discriminator_forward.7} parent=0 // pred_fallthru
    _
  // Predicated region
  $region18: #{discriminator_forward.7} parent=0 // pred_check
    _
  $region19: #{discriminator_forward.7} parent=0 // pred_check_branch
    %609 = sbr.rel (0) target = $region21
  $region20: #{discriminator_forward.7} parent=0 // pred_region
    _
  $region21: #{discriminator_forward.7} parent=0 // pred_fallthru
    _
  // Predicated region
  $region22: #{discriminator_forward.7} parent=0 // pred_check
    _
  $region23: #{discriminator_forward.7} parent=0 // pred_check_branch
    %611 = sbr.rel (0) target = $region25
  $region24: #{discriminator_forward.7} parent=0 // pred_region
    _
  $region25: #{discriminator_forward.7} parent=0 // pred_fallthru
    _

</llo_original>
